<compile_context>
chip_gen: v6e
topology: v6e:2x2x1
jax: 0.10.0
libtpu: 0.0.40
codegen_flags: <defaults>
</compile_context>

<pallas_src>
import functools

import jax
import jax.numpy as jnp
from jax.experimental import pallas as pl
from jax.experimental.pallas import tpu as pltpu

_LANE = 128
_SUBLANE = 8
_FUSED_MAX_N_PAD = 512               # use the fused single-kernel path when A_hat is small
_VMEM_LIMIT = 32 * 1024 * 1024       # safe on v5e/v6e/v7x; tiles below need only a few MiB


def _round_up(x, m):
    return ((x + m - 1) // m) * m


def _pick_tile(n_pad):
    """Largest of 512/256/128 that divides n_pad (n_pad is a multiple of 128)."""
    for t in (512, 256, 128):
        if n_pad % t == 0:
            return t
    return n_pad


def _pad_to(x, shape):
    pads = [(0, s - d) for d, s in zip(x.shape, shape)]
    return jnp.pad(x, pads)


def _full_spec(shape):
    # single-invocation kernel (no grid): block = full array
    return pl.BlockSpec(shape, lambda: (0,) * len(shape))


# ----------------------------------------------------------------------------
# Pallas kernels
# ----------------------------------------------------------------------------
def _fused_small_kernel(a_ref, x_ref, cw_ref, cb_ref, p_ref,
                        w1_ref, b1_ref, w2_ref, b2_ref, w3_ref, b3_ref, o_ref):
    """Small-N path: A_hat resident in VMEM once; all layers + pool + MLP fused."""
    a = a_ref[...]                                   # (N, N) bf16
    h = x_ref[...]                                   # (N, F) bf16
    num_layers = cw_ref.shape[0]
    for l in range(num_layers):                      # static unroll over conv layers
        xw = jnp.dot(h, cw_ref[l], preferred_element_type=jnp.float32)
        agg = jnp.dot(a, xw.astype(jnp.bfloat16),
                      preferred_element_type=jnp.float32)
        h = jnp.maximum(agg + cb_ref[l], 0.0).astype(jnp.bfloat16)
    pooled = jnp.dot(p_ref[...], h, preferred_element_type=jnp.float32)
    h1 = jnp.maximum(
        jnp.dot(pooled.astype(jnp.bfloat16), w1_ref[...],
                preferred_element_type=jnp.float32) + b1_ref[...], 0.0)
    # dropout (eval mode) == identity
    h2 = jnp.maximum(
        jnp.dot(h1.astype(jnp.bfloat16), w2_ref[...],
                preferred_element_type=jnp.float32) + b2_ref[...], 0.0)
    # dropout (eval mode) == identity
    o_ref[...] = (jnp.dot(h2.astype(jnp.bfloat16), w3_ref[...],
                          preferred_element_type=jnp.float32) + b3_ref[...])


def _xw_kernel(x_ref, w_ref, o_ref):
    """Row-tiled XW = X @ W (hoisted out of the A-tiled reduction)."""
    o_ref[...] = jnp.dot(x_ref[...], w_ref[...],
                         preferred_element_type=jnp.float32).astype(o_ref.dtype)


def _aggregate_kernel(a_ref, xw_ref, b_ref, o_ref, acc_ref):
    """out = relu(A_hat @ XW + b), tiled over (row tiles, source-node k tiles)."""
    k = pl.program_id(1)

    @pl.when(k == 0)
    def _():
        acc_ref[...] = jnp.zeros_like(acc_ref)

    acc_ref[...] += jnp.dot(a_ref[...], xw_ref[...],
                            preferred_element_type=jnp.float32)

    @pl.when(k == pl.num_programs(1) - 1)
    def _():
        o_ref[...] = jnp.maximum(acc_ref[...] + b_ref[...], 0.0).astype(o_ref.dtype)


def _pool_mlp_kernel(p_ref, x_ref, w1_ref, b1_ref, w2_ref, b2_ref,
                     w3_ref, b3_ref, o_ref, acc_ref):
    """global_add_pool accumulated over node tiles; MLP head in the epilogue."""
    k = pl.program_id(0)

    @pl.when(k == 0)
    def _():
        acc_ref[...] = jnp.zeros_like(acc_ref)

    acc_ref[...] += jnp.dot(p_ref[...], x_ref[...],
                            preferred_element_type=jnp.float32)

    @pl.when(k == pl.num_programs(0) - 1)
    def _():
        pooled = acc_ref[...].astype(jnp.bfloat16)
        h1 = jnp.maximum(
            jnp.dot(pooled, w1_ref[...],
                    preferred_element_type=jnp.float32) + b1_ref[...], 0.0)
        # dropout (eval mode) == identity
        h2 = jnp.maximum(
            jnp.dot(h1.astype(jnp.bfloat16), w2_ref[...],
                    preferred_element_type=jnp.float32) + b2_ref[...], 0.0)
        # dropout (eval mode) == identity
        o_ref[...] = (jnp.dot(h2.astype(jnp.bfloat16), w3_ref[...],
                              preferred_element_type=jnp.float32) + b3_ref[...])


# ----------------------------------------------------------------------------
# pallas_call wrappers
# ----------------------------------------------------------------------------
def _fused_small_forward(a_hat, x, cw, cb, p, w1, b1, w2, b2, w3, b3):
    g_pad = p.shape[0]
    c_pad = w3.shape[1]
    args = (a_hat, x, cw, cb, p, w1, b1, w2, b2, w3, b3)
    return pl.pallas_call(
        _fused_small_kernel,
        out_shape=jax.ShapeDtypeStruct((g_pad, c_pad), jnp.float32),
        in_specs=[_full_spec(a.shape) for a in args],
        out_specs=_full_spec((g_pad, c_pad)),
        compiler_params=pltpu.CompilerParams(vmem_limit_bytes=_VMEM_LIMIT),
    )(*args)


def _xw_matmul(x, w):
    n_pad, f_in = x.shape
    f_out = w.shape[1]
    tm = _pick_tile(n_pad)
    return pl.pallas_call(
        _xw_kernel,
        out_shape=jax.ShapeDtypeStruct((n_pad, f_out), jnp.bfloat16),
        grid_spec=pltpu.PrefetchScalarGridSpec(
            num_scalar_prefetch=0,
            grid=(n_pad // tm,),
            in_specs=[pl.BlockSpec((tm, f_in), lambda i: (i, 0)),
                      pl.BlockSpec((f_in, f_out), lambda i: (0, 0))],
            out_specs=pl.BlockSpec((tm, f_out), lambda i: (i, 0))),
        compiler_params=pltpu.CompilerParams(
            dimension_semantics=("parallel",),
            vmem_limit_bytes=_VMEM_LIMIT),
    )(x, w)


def _aggregate(a_hat, xw, b):
    n_pad = a_hat.shape[0]
    f_out = xw.shape[1]
    tile = _pick_tile(n_pad)
    tm = tk = tile
    return pl.pallas_call(
        _aggregate_kernel,
        out_shape=jax.ShapeDtypeStruct((n_pad, f_out), jnp.bfloat16),
        grid_spec=pltpu.PrefetchScalarGridSpec(
            num_scalar_prefetch=0,
            grid=(n_pad // tm, n_pad // tk),            # reduction axis last
            in_specs=[pl.BlockSpec((tm, tk), lambda i, k: (i, k)),
                      pl.BlockSpec((tk, f_out), lambda i, k: (k, 0)),
                      pl.BlockSpec((1, f_out), lambda i, k: (0, 0))],
            out_specs=pl.BlockSpec((tm, f_out), lambda i, k: (i, 0)),
            scratch_shapes=[pltpu.VMEM((tm, f_out), jnp.float32)]),
        compiler_params=pltpu.CompilerParams(
            dimension_semantics=("parallel", "arbitrary"),
            vmem_limit_bytes=_VMEM_LIMIT),
    )(a_hat, xw, b)


def _pool_and_mlp(p, x, w1, b1, w2, b2, w3, b3):
    g_pad, n_pad = p.shape
    f_pad = x.shape[1]
    c_pad = w3.shape[1]
    tk = _pick_tile(n_pad)

    def full(shape):
        return pl.BlockSpec(shape, lambda k: (0,) * len(shape))

    return pl.pallas_call(
        _pool_mlp_kernel,
        out_shape=jax.ShapeDtypeStruct((g_pad, c_pad), jnp.float32),
        grid_spec=pltpu.PrefetchScalarGridSpec(
            num_scalar_prefetch=0,
            grid=(n_pad // tk,),
            in_specs=[pl.BlockSpec((g_pad, tk), lambda k: (0, k)),
                      pl.BlockSpec((tk, f_pad), lambda k: (k, 0)),
                      full(w1.shape), full(b1.shape),
                      full(w2.shape), full(b2.shape),
                      full(w3.shape), full(b3.shape)],
            out_specs=pl.BlockSpec((g_pad, c_pad), lambda k: (0, 0)),
            scratch_shapes=[pltpu.VMEM((g_pad, f_pad), jnp.float32)]),
        compiler_params=pltpu.CompilerParams(
            dimension_semantics=("arbitrary",),
            vmem_limit_bytes=_VMEM_LIMIT),
    )(p, x, w1, b1, w2, b2, w3, b3)


# ----------------------------------------------------------------------------
# Glue (plain JAX): graph preprocessing + parameter setup
# ----------------------------------------------------------------------------
def build_normalized_adjacency(edge_index, num_nodes):
    """Dense D^{-1/2} (A + I) D^{-1/2} as used by GCNConv (gcn_norm)."""
    src, dst = edge_index[0], edge_index[1]
    a = jnp.zeros((num_nodes, num_nodes), jnp.float32).at[dst, src].add(1.0)
    a = a + jnp.eye(num_nodes, dtype=jnp.float32)          # add self loops
    deg = a.sum(axis=1)
    dinv = jnp.where(deg > 0, 1.0 / jnp.sqrt(deg), 0.0)
    return dinv[:, None] * a * dinv[None, :]


def build_pool_matrix(batch, num_graphs):
    """One-hot [G, N] matrix so that P @ X == global_add_pool(X, batch)."""
    return (batch[None, :] == jnp.arange(num_graphs)[:, None]).astype(jnp.float32)


def init_params(key, in_size, nb_class, d_model, nb_layers):
    keys = jax.random.split(key, nb_layers + 3)
    params = {}
    convs = []
    f_in = in_size
    for i in range(nb_layers):
        scale = 1.0 / jnp.sqrt(jnp.float32(f_in))
        w = jax.random.normal(keys[i], (f_in, d_model), jnp.float32) * scale
        b = jnp.zeros((d_model,), jnp.float32)
        convs.append((w, b))
        f_in = d_model
    params["convs"] = convs
    dims = [(d_model, d_model), (d_model, d_model // 2), (d_model // 2, nb_class)]
    fcs = []
    for j, (di, do) in enumerate(dims):
        scale = 1.0 / jnp.sqrt(jnp.float32(di))
        w = jax.random.normal(keys[nb_layers + j], (di, do), jnp.float32) * scale
        b = jnp.zeros((do,), jnp.float32)
        fcs.append((w, b))
    params["fcs"] = fcs
    return params


@functools.partial(jax.jit, static_argnames=("num_graphs",))
def gcn_forward(params, x, edge_index, batch, num_graphs):
    n, in_size = x.shape
    d_model = params["convs"][0][0].shape[1]
    h2_dim = params["fcs"][1][0].shape[1]
    n_cls = params["fcs"][2][0].shape[1]

    f_pad = _round_up(max(in_size, d_model), _LANE)
    h2_pad = _round_up(h2_dim, _LANE)
    c_pad = _round_up(n_cls, _LANE)
    n_pad = _round_up(n, _LANE)
    g_pad = _round_up(num_graphs, _SUBLANE)

    # Preprocess graph structure (dense) and pad; bf16 for the big byte streams.
    a_hat = _pad_to(build_normalized_adjacency(edge_index, n),
                    (n_pad, n_pad)).astype(jnp.bfloat16)
    pool_mat = _pad_to(build_pool_matrix(batch, num_graphs),
                       (g_pad, n_pad)).astype(jnp.bfloat16)
    h = _pad_to(x, (n_pad, f_pad)).astype(jnp.bfloat16)

    # Stacked, padded conv weights/biases: [L, f_pad, f_pad] / [L, 1, f_pad]
    cw = jnp.stack([_pad_to(w, (f_pad, f_pad))
                    for (w, _) in params["convs"]]).astype(jnp.bfloat16)
    cb = jnp.stack([_pad_to(b.reshape(1, -1), (1, f_pad))
                    for (_, b) in params["convs"]]).astype(jnp.float32)

    (w1, b1), (w2, b2), (w3, b3) = params["fcs"]
    w1p = _pad_to(w1, (f_pad, f_pad)).astype(jnp.bfloat16)
    w2p = _pad_to(w2, (f_pad, h2_pad)).astype(jnp.bfloat16)
    w3p = _pad_to(w3, (h2_pad, c_pad)).astype(jnp.bfloat16)
    b1p = _pad_to(b1.reshape(1, -1), (1, f_pad)).astype(jnp.float32)
    b2p = _pad_to(b2.reshape(1, -1), (1, h2_pad)).astype(jnp.float32)
    b3p = _pad_to(b3.reshape(1, -1), (1, c_pad)).astype(jnp.float32)

    if n_pad <= _FUSED_MAX_N_PAD:
        # Small-N: everything in one kernel, A_hat read from HBM exactly once.
        out_pad = _fused_small_forward(a_hat, h, cw, cb, pool_mat,
                                       w1p, b1p, w2p, b2p, w3p, b3p)
    else:
        # Large-N: tiled / pipelined path.
        for l in range(cw.shape[0]):
            xw = _xw_matmul(h, cw[l])                   # X @ W  (hoisted)
            h = _aggregate(a_hat, xw, cb[l])            # relu(A_hat @ XW + b)
        out_pad = _pool_and_mlp(pool_mat, h, w1p, b1p, w2p, b2p, w3p, b3p)

    return out_pad[:num_graphs, :n_cls]


# ----------------------------------------------------------------------------
def _make_example(key, n, in_size, num_graphs):
    """Deterministic random graph batch: n nodes split evenly across graphs."""
    k_x, k_e = jax.random.split(key)
    x = jax.random.normal(k_x, (n, in_size), jnp.float32)
    npg = n // num_graphs
    batch = jnp.repeat(jnp.arange(num_graphs, dtype=jnp.int32), npg)
    e_half = 4 * n
    ks, kd, kg = jax.random.split(k_e, 3)
    g_of_edge = jax.random.randint(kg, (e_half,), 0, num_graphs)
    src = jax.random.randint(ks, (e_half,), 0, npg) + g_of_edge * npg
    dst = jax.random.randint(kd, (e_half,), 0, npg) + g_of_edge * npg
    edge_index = jnp.stack([jnp.concatenate([src, dst]),
                            jnp.concatenate([dst, src])], 0).astype(jnp.int32)
    return x, edge_index, batch


if __name__ == "__main__":
    IN_SIZE, D_MODEL, NB_CLASS, NB_LAYERS, G = 4, 32, 3, 4, 2

    key = jax.random.PRNGKey(0)
    k_p, k_small, k_big = jax.random.split(key, 3)
    params = init_params(k_p, IN_SIZE, NB_CLASS, D_MODEL, NB_LAYERS)

    # Small batch (16 nodes, 2 graphs) -> fused single-kernel path.
    x_s, ei_s, batch_s = _make_example(k_small, n=16, in_size=IN_SIZE, num_graphs=G)
    out_small = gcn_forward(params, x_s, ei_s, batch_s, G)
    jax.block_until_ready(out_small)
    assert out_small.shape == (G, NB_CLASS)

    # Larger batch (640 nodes, 2 graphs) -> tiled, pipelined accumulator path.
    x_b, ei_b, batch_b = _make_example(k_big, n=640, in_size=IN_SIZE, num_graphs=G)
    out_big = gcn_forward(params, x_b, ei_b, batch_b, G)
    jax.block_until_ready(out_big)
    assert out_big.shape == (G, NB_CLASS)

    print("KERNEL_OK")
</pallas_src>

<mosaic_0001>
module attributes {stable_mosaic.version = 11 : i64} {
  func.func private @main(%arg0: i32) attributes {dimension_semantics = [#tpu.dimension_semantics<core_parallel>], iteration_bounds = array<i64: 2>, tpu.core_type = #tpu.core_type<sc_scalar_subcore>, window_params = []} {
    return
  }
}

module attributes {stable_mosaic.version = 11 : i64} {
  func.func private @main(%arg0: i32) attributes {dimension_semantics = [#tpu.dimension_semantics<core_parallel>], iteration_bounds = array<i64: 2>, tpu.core_type = #tpu.core_type<sc_scalar_subcore>, window_params = []} {
    return
  }
}

module attributes {stable_mosaic.version = 11 : i64} {
  func.func @_fused_small_kernel(%arg0: memref<128x128xbf16, #tpu.memory_space<vmem>>, %arg1: memref<128x128xbf16, #tpu.memory_space<vmem>>, %arg2: memref<4x128x128xbf16, #tpu.memory_space<vmem>>, %arg3: memref<4x1x128xf32, #tpu.memory_space<vmem>>, %arg4: memref<8x128xbf16, #tpu.memory_space<vmem>>, %arg5: memref<128x128xbf16, #tpu.memory_space<vmem>>, %arg6: memref<1x128xf32, #tpu.memory_space<vmem>>, %arg7: memref<128x128xbf16, #tpu.memory_space<vmem>>, %arg8: memref<1x128xf32, #tpu.memory_space<vmem>>, %arg9: memref<128x128xbf16, #tpu.memory_space<vmem>>, %arg10: memref<1x128xf32, #tpu.memory_space<vmem>>, %arg11: memref<8x128xf32, #tpu.memory_space<vmem>>) attributes {dimension_semantics = [], scalar_prefetch = 0 : i64, scratch_operands = 0 : i64, tpu.core_type = #tpu.core_type<tc>} {
    %c0 = arith.constant 0 : index
    %c0_0 = arith.constant 0 : index
    %0 = vector.load %arg0[%c0, %c0_0] : memref<128x128xbf16, #tpu.memory_space<vmem>>, vector<128x128xbf16>
    %c0_1 = arith.constant 0 : index
    %c0_2 = arith.constant 0 : index
    %1 = vector.load %arg1[%c0_1, %c0_2] : memref<128x128xbf16, #tpu.memory_space<vmem>>, vector<128x128xbf16>
    %c0_3 = arith.constant 0 : index
    %c0_4 = arith.constant 0 : index
    %c0_5 = arith.constant 0 : index
    %2 = vector.load %arg2[%c0_3, %c0_4, %c0_5] : memref<4x128x128xbf16, #tpu.memory_space<vmem>>, vector<1x128x128xbf16>
    %3 = vector.shape_cast %2 : vector<1x128x128xbf16> to vector<128x128xbf16>
    %cst = arith.constant dense<0.000000e+00> : vector<128x128xf32>
    %4 = tpu.matmul %1, %3, %cst {dimension_numbers = #tpu.dot_dimension_numbers<[1], [0], [0], [1], [0, 0, 1, 1], [], []>} : vector<128x128xbf16>, vector<128x128xbf16>, vector<128x128xf32> -> vector<128x128xf32>
    %5 = arith.truncf %4 : vector<128x128xf32> to vector<128x128xbf16>
    %cst_6 = arith.constant dense<0.000000e+00> : vector<128x128xf32>
    %6 = tpu.matmul %0, %5, %cst_6 {dimension_numbers = #tpu.dot_dimension_numbers<[1], [0], [0], [1], [0, 0, 1, 1], [], []>} : vector<128x128xbf16>, vector<128x128xbf16>, vector<128x128xf32> -> vector<128x128xf32>
    %c0_7 = arith.constant 0 : index
    %c0_8 = arith.constant 0 : index
    %c0_9 = arith.constant 0 : index
    %7 = vector.load %arg3[%c0_7, %c0_8, %c0_9] : memref<4x1x128xf32, #tpu.memory_space<vmem>>, vector<1x1x128xf32>
    %8 = vector.shape_cast %7 : vector<1x1x128xf32> to vector<1x128xf32>
    %9 = vector.broadcast %8 : vector<1x128xf32> to vector<128x128xf32>
    %10 = arith.addf %6, %9 : vector<128x128xf32>
    %cst_10 = arith.constant 0.000000e+00 : f32
    %11 = vector.broadcast %cst_10 : f32 to vector<128x128xf32>
    %12 = arith.maximumf %10, %11 : vector<128x128xf32>
    %13 = arith.truncf %12 : vector<128x128xf32> to vector<128x128xbf16>
    %c1 = arith.constant 1 : index
    %c0_11 = arith.constant 0 : index
    %c0_12 = arith.constant 0 : index
    %14 = vector.load %arg2[%c1, %c0_11, %c0_12] : memref<4x128x128xbf16, #tpu.memory_space<vmem>>, vector<1x128x128xbf16>
    %15 = vector.shape_cast %14 : vector<1x128x128xbf16> to vector<128x128xbf16>
    %cst_13 = arith.constant dense<0.000000e+00> : vector<128x128xf32>
    %16 = tpu.matmul %13, %15, %cst_13 {dimension_numbers = #tpu.dot_dimension_numbers<[1], [0], [0], [1], [0, 0, 1, 1], [], []>} : vector<128x128xbf16>, vector<128x128xbf16>, vector<128x128xf32> -> vector<128x128xf32>
    %17 = arith.truncf %16 : vector<128x128xf32> to vector<128x128xbf16>
    %cst_14 = arith.constant dense<0.000000e+00> : vector<128x128xf32>
    %18 = tpu.matmul %0, %17, %cst_14 {dimension_numbers = #tpu.dot_dimension_numbers<[1], [0], [0], [1], [0, 0, 1, 1], [], []>} : vector<128x128xbf16>, vector<128x128xbf16>, vector<128x128xf32> -> vector<128x128xf32>
    %c1_15 = arith.constant 1 : index
    %c0_16 = arith.constant 0 : index
    %c0_17 = arith.constant 0 : index
    %19 = vector.load %arg3[%c1_15, %c0_16, %c0_17] : memref<4x1x128xf32, #tpu.memory_space<vmem>>, vector<1x1x128xf32>
    %20 = vector.shape_cast %19 : vector<1x1x128xf32> to vector<1x128xf32>
    %21 = vector.broadcast %20 : vector<1x128xf32> to vector<128x128xf32>
    %22 = arith.addf %18, %21 : vector<128x128xf32>
    %cst_18 = arith.constant 0.000000e+00 : f32
    %23 = vector.broadcast %cst_18 : f32 to vector<128x128xf32>
    %24 = arith.maximumf %22, %23 : vector<128x128xf32>
    %25 = arith.truncf %24 : vector<128x128xf32> to vector<128x128xbf16>
    %c2 = arith.constant 2 : index
    %c0_19 = arith.constant 0 : index
    %c0_20 = arith.constant 0 : index
    %26 = vector.load %arg2[%c2, %c0_19, %c0_20] : memref<4x128x128xbf16, #tpu.memory_space<vmem>>, vector<1x128x128xbf16>
    %27 = vector.shape_cast %26 : vector<1x128x128xbf16> to vector<128x128xbf16>
    %cst_21 = arith.constant dense<0.000000e+00> : vector<128x128xf32>
    %28 = tpu.matmul %25, %27, %cst_21 {dimension_numbers = #tpu.dot_dimension_numbers<[1], [0], [0], [1], [0, 0, 1, 1], [], []>} : vector<128x128xbf16>, vector<128x128xbf16>, vector<128x128xf32> -> vector<128x128xf32>
    %29 = arith.truncf %28 : vector<128x128xf32> to vector<128x128xbf16>
    %cst_22 = arith.constant dense<0.000000e+00> : vector<128x128xf32>
    %30 = tpu.matmul %0, %29, %cst_22 {dimension_numbers = #tpu.dot_dimension_numbers<[1], [0], [0], [1], [0, 0, 1, 1], [], []>} : vector<128x128xbf16>, vector<128x128xbf16>, vector<128x128xf32> -> vector<128x128xf32>
    %c2_23 = arith.constant 2 : index
    %c0_24 = arith.constant 0 : index
    %c0_25 = arith.constant 0 : index
    %31 = vector.load %arg3[%c2_23, %c0_24, %c0_25] : memref<4x1x128xf32, #tpu.memory_space<vmem>>, vector<1x1x128xf32>
    %32 = vector.shape_cast %31 : vector<1x1x128xf32> to vector<1x128xf32>
    %33 = vector.broadcast %32 : vector<1x128xf32> to vector<128x128xf32>
    %34 = arith.addf %30, %33 : vector<128x128xf32>
    %cst_26 = arith.constant 0.000000e+00 : f32
    %35 = vector.broadcast %cst_26 : f32 to vector<128x128xf32>
    %36 = arith.maximumf %34, %35 : vector<128x128xf32>
    %37 = arith.truncf %36 : vector<128x128xf32> to vector<128x128xbf16>
    %c3 = arith.constant 3 : index
    %c0_27 = arith.constant 0 : index
    %c0_28 = arith.constant 0 : index
    %38 = vector.load %arg2[%c3, %c0_27, %c0_28] : memref<4x128x128xbf16, #tpu.memory_space<vmem>>, vector<1x128x128xbf16>
    %39 = vector.shape_cast %38 : vector<1x128x128xbf16> to vector<128x128xbf16>
    %cst_29 = arith.constant dense<0.000000e+00> : vector<128x128xf32>
    %40 = tpu.matmul %37, %39, %cst_29 {dimension_numbers = #tpu.dot_dimension_numbers<[1], [0], [0], [1], [0, 0, 1, 1], [], []>} : vector<128x128xbf16>, vector<128x128xbf16>, vector<128x128xf32> -> vector<128x128xf32>
    %41 = arith.truncf %40 : vector<128x128xf32> to vector<128x128xbf16>
    %cst_30 = arith.constant dense<0.000000e+00> : vector<128x128xf32>
    %42 = tpu.matmul %0, %41, %cst_30 {dimension_numbers = #tpu.dot_dimension_numbers<[1], [0], [0], [1], [0, 0, 1, 1], [], []>} : vector<128x128xbf16>, vector<128x128xbf16>, vector<128x128xf32> -> vector<128x128xf32>
    %c3_31 = arith.constant 3 : index
    %c0_32 = arith.constant 0 : index
    %c0_33 = arith.constant 0 : index
    %43 = vector.load %arg3[%c3_31, %c0_32, %c0_33] : memref<4x1x128xf32, #tpu.memory_space<vmem>>, vector<1x1x128xf32>
    %44 = vector.shape_cast %43 : vector<1x1x128xf32> to vector<1x128xf32>
    %45 = vector.broadcast %44 : vector<1x128xf32> to vector<128x128xf32>
    %46 = arith.addf %42, %45 : vector<128x128xf32>
    %cst_34 = arith.constant 0.000000e+00 : f32
    %47 = vector.broadcast %cst_34 : f32 to vector<128x128xf32>
    %48 = arith.maximumf %46, %47 : vector<128x128xf32>
    %49 = arith.truncf %48 : vector<128x128xf32> to vector<128x128xbf16>
    %c0_35 = arith.constant 0 : index
    %c0_36 = arith.constant 0 : index
    %50 = vector.load %arg4[%c0_35, %c0_36] : memref<8x128xbf16, #tpu.memory_space<vmem>>, vector<8x128xbf16>
    %cst_37 = arith.constant dense<0.000000e+00> : vector<8x128xf32>
    %51 = tpu.matmul %50, %49, %cst_37 {dimension_numbers = #tpu.dot_dimension_numbers<[1], [0], [0], [1], [0, 0, 1, 1], [], []>} : vector<8x128xbf16>, vector<128x128xbf16>, vector<8x128xf32> -> vector<8x128xf32>
    %52 = arith.truncf %51 : vector<8x128xf32> to vector<8x128xbf16>
    %c0_38 = arith.constant 0 : index
    %c0_39 = arith.constant 0 : index
    %53 = vector.load %arg5[%c0_38, %c0_39] : memref<128x128xbf16, #tpu.memory_space<vmem>>, vector<128x128xbf16>
    %cst_40 = arith.constant dense<0.000000e+00> : vector<8x128xf32>
    %54 = tpu.matmul %52, %53, %cst_40 {dimension_numbers = #tpu.dot_dimension_numbers<[1], [0], [0], [1], [0, 0, 1, 1], [], []>} : vector<8x128xbf16>, vector<128x128xbf16>, vector<8x128xf32> -> vector<8x128xf32>
    %c0_41 = arith.constant 0 : index
    %c0_42 = arith.constant 0 : index
    %55 = vector.load %arg6[%c0_41, %c0_42] : memref<1x128xf32, #tpu.memory_space<vmem>>, vector<1x128xf32>
    %56 = vector.broadcast %55 : vector<1x128xf32> to vector<8x128xf32>
    %57 = arith.addf %54, %56 : vector<8x128xf32>
    %cst_43 = arith.constant 0.000000e+00 : f32
    %58 = vector.broadcast %cst_43 : f32 to vector<8x128xf32>
    %59 = arith.maximumf %57, %58 : vector<8x128xf32>
    %60 = arith.truncf %59 : vector<8x128xf32> to vector<8x128xbf16>
    %c0_44 = arith.constant 0 : index
    %c0_45 = arith.constant 0 : index
    %61 = vector.load %arg7[%c0_44, %c0_45] : memref<128x128xbf16, #tpu.memory_space<vmem>>, vector<128x128xbf16>
    %cst_46 = arith.constant dense<0.000000e+00> : vector<8x128xf32>
    %62 = tpu.matmul %60, %61, %cst_46 {dimension_numbers = #tpu.dot_dimension_numbers<[1], [0], [0], [1], [0, 0, 1, 1], [], []>} : vector<8x128xbf16>, vector<128x128xbf16>, vector<8x128xf32> -> vector<8x128xf32>
    %c0_47 = arith.constant 0 : index
    %c0_48 = arith.constant 0 : index
    %63 = vector.load %arg8[%c0_47, %c0_48] : memref<1x128xf32, #tpu.memory_space<vmem>>, vector<1x128xf32>
    %64 = vector.broadcast %63 : vector<1x128xf32> to vector<8x128xf32>
    %65 = arith.addf %62, %64 : vector<8x128xf32>
    %cst_49 = arith.constant 0.000000e+00 : f32
    %66 = vector.broadcast %cst_49 : f32 to vector<8x128xf32>
    %67 = arith.maximumf %65, %66 : vector<8x128xf32>
    %68 = arith.truncf %67 : vector<8x128xf32> to vector<8x128xbf16>
    %c0_50 = arith.constant 0 : index
    %c0_51 = arith.constant 0 : index
    %69 = vector.load %arg9[%c0_50, %c0_51] : memref<128x128xbf16, #tpu.memory_space<vmem>>, vector<128x128xbf16>
    %cst_52 = arith.constant dense<0.000000e+00> : vector<8x128xf32>
    %70 = tpu.matmul %68, %69, %cst_52 {dimension_numbers = #tpu.dot_dimension_numbers<[1], [0], [0], [1], [0, 0, 1, 1], [], []>} : vector<8x128xbf16>, vector<128x128xbf16>, vector<8x128xf32> -> vector<8x128xf32>
    %c0_53 = arith.constant 0 : index
    %c0_54 = arith.constant 0 : index
    %71 = vector.load %arg10[%c0_53, %c0_54] : memref<1x128xf32, #tpu.memory_space<vmem>>, vector<1x128xf32>
    %72 = vector.broadcast %71 : vector<1x128xf32> to vector<8x128xf32>
    %73 = arith.addf %70, %72 : vector<8x128xf32>
    %c0_55 = arith.constant 0 : index
    %c0_56 = arith.constant 0 : index
    %74 = vector.load %arg11[%c0_55, %c0_56] : memref<8x128xf32, #tpu.memory_space<vmem>>, vector<8x128xf32>
    tpu.vector_store %arg11[%c0_55, %c0_56], %73 {strides = array<i32>} : memref<8x128xf32, #tpu.memory_space<vmem>>, vector<8x128xf32>,
    return
  }
}

</mosaic_0001>

<llo_original>
// kernel: gcn_forward.1
$region0: #{gcn_forward.1}
  #allocation0 [shape = 'u32[]', space=smem, size = 0x4, offset = 0x4, fixed_abs, tag = 'smem constant byte address 0x4 - core index']
  #allocation1 [shape = 'u32[144,128]{1,0:T(1,128)}', space=vmem, size = 0x12000, scoped, tag = 'internal scratch']
  %s0 = inlined_call_operand.vmem [shape: bf16[128,128], index: 0, kind: input, shape index: {}]
  %s1 = inlined_call_operand.vmem [shape: bf16[128,128], index: 1, kind: input, shape index: {}]
  %s2 = inlined_call_operand.vmem [shape: bf16[4,128,128], index: 2, kind: input, shape index: {}]
  %s3 = inlined_call_operand.vmem [shape: f32[4,1,128], index: 3, kind: input, shape index: {}]
  %s4 = inlined_call_operand.vmem [shape: bf16[8,128], index: 4, kind: input, shape index: {}]
  %s5 = inlined_call_operand.vmem [shape: bf16[128,128], index: 5, kind: input, shape index: {}]
  %s6 = inlined_call_operand.vmem [shape: f32[1,128], index: 6, kind: input, shape index: {}]
  %s7 = inlined_call_operand.vmem [shape: bf16[128,128], index: 7, kind: input, shape index: {}]
  %s8 = inlined_call_operand.vmem [shape: f32[1,128], index: 8, kind: input, shape index: {}]
  %s9 = inlined_call_operand.vmem [shape: bf16[128,128], index: 9, kind: input, shape index: {}]
  %s10 = inlined_call_operand.vmem [shape: f32[1,128], index: 10, kind: input, shape index: {}]
  %s11 = inlined_call_operand.vmem [shape: f32[8,128], index: 11, kind: output, shape index: {}]
  %s12 = sld [smem:[#allocation0]]
  $region54: #{gcn_forward.1} parent=0
    _
  %s14 = ssub.s32 1, %s12
  %s15 = scalar_select 0, %s14, %s12
  // Predicated region
  $region2: #{gcn_forward.1} parent=0 // pred_check
    _
  $region3: #{gcn_forward.1} parent=0 // pred_check_branch
    %17 = sbr.rel (0) target = $region5
  $region4: #{gcn_forward.1} parent=0 // pred_region
    _
  $region5: #{gcn_forward.1} parent=0 // pred_fallthru
    _
  // Predicated region
  $region6: #{gcn_forward.1} parent=0 // pred_check
    _
  $region7: #{gcn_forward.1} parent=0 // pred_check_branch
    %19 = sbr.rel (0) target = $region9
  $region8: #{gcn_forward.1} parent=0 // pred_region
    _
  $region9: #{gcn_forward.1} parent=0 // pred_fallthru
    _
  // Predicated region
  $region10: #{gcn_forward.1} parent=0 // pred_check
    _
  $region11: #{gcn_forward.1} parent=0 // pred_check_branch
    %21 = sbr.rel (0) target = $region13
  $region12: #{gcn_forward.1} parent=0 // pred_region
    _
  $region13: #{gcn_forward.1} parent=0 // pred_fallthru
    _
  // Predicated region
  $region14: #{gcn_forward.1} parent=0 // pred_check
    _
  $region15: #{gcn_forward.1} parent=0 // pred_check_branch
    %23 = sbr.rel (0) target = $region17
  $region16: #{gcn_forward.1} parent=0 // pred_region
    _
  $region17: #{gcn_forward.1} parent=0 // pred_fallthru
    _
  // Predicated region
  $region18: #{gcn_forward.1} parent=0 // pred_check
    _
  $region19: #{gcn_forward.1} parent=0 // pred_check_branch
    %25 = sbr.rel (0) target = $region21
  $region20: #{gcn_forward.1} parent=0 // pred_region
    _
  $region21: #{gcn_forward.1} parent=0 // pred_fallthru
    _
  // Predicated region
  $region22: #{gcn_forward.1} parent=0 // pred_check
    _
  $region23: #{gcn_forward.1} parent=0 // pred_check_branch
    %27 = sbr.rel (0) target = $region25
  $region24: #{gcn_forward.1} parent=0 // pred_region
    _
  $region25: #{gcn_forward.1} parent=0 // pred_fallthru
    _
  // Predicated region
  $region26: #{gcn_forward.1} parent=0 // pred_check
    _
  $region27: #{gcn_forward.1} parent=0 // pred_check_branch
    %29 = sbr.rel (0) target = $region29
  $region28: #{gcn_forward.1} parent=0 // pred_region
    _
  $region29: #{gcn_forward.1} parent=0 // pred_fallthru
    _
  // Predicated region
  $region30: #{gcn_forward.1} parent=0 // pred_check
    _
  $region31: #{gcn_forward.1} parent=0 // pred_check_branch
    %31 = sbr.rel (0) target = $region33
  $region32: #{gcn_forward.1} parent=0 // pred_region
    _
  $region33: #{gcn_forward.1} parent=0 // pred_fallthru
    _
  // Predicated region
  $region34: #{gcn_forward.1} parent=0 // pred_check
    _
  $region35: #{gcn_forward.1} parent=0 // pred_check_branch
    %33 = sbr.rel (0) target = $region37
  $region36: #{gcn_forward.1} parent=0 // pred_region
    _
  $region37: #{gcn_forward.1} parent=0 // pred_fallthru
    _
  // Predicated region
  $region38: #{gcn_forward.1} parent=0 // pred_check
    _
  $region39: #{gcn_forward.1} parent=0 // pred_check_branch
    %35 = sbr.rel (0) target = $region41
  $region40: #{gcn_forward.1} parent=0 // pred_region
    _
  $region41: #{gcn_forward.1} parent=0 // pred_fallthru
    _
  // Predicated region
  $region42: #{gcn_forward.1} parent=0 // pred_check
    _
  $region43: #{gcn_forward.1} parent=0 // pred_check_branch
    %37 = sbr.rel (0) target = $region45
  $region44: #{gcn_forward.1} parent=0 // pred_region
    _
  $region45: #{gcn_forward.1} parent=0 // pred_fallthru
    _
  %v39 = vld [vmem:[%s0] sm:$0xf]
  %v40 = vld [vmem:[%s0 + $0x4] sm:$0xf]
  %v41 = vld [vmem:[%s0 + $0x8] sm:$0xf]
  %v42 = vld [vmem:[%s0 + $0xc] sm:$0xf]
  %v43 = vld [vmem:[%s0 + $0x10] sm:$0xf]
  %v44 = vld [vmem:[%s0 + $0x14] sm:$0xf]
  %v45 = vld [vmem:[%s0 + $0x18] sm:$0xf]
  %v46 = vld [vmem:[%s0 + $0x1c] sm:$0xf]
  %v47 = vld [vmem:[%s0 + $0x20] sm:$0xf]
  %v48 = vld [vmem:[%s0 + $0x24] sm:$0xf]
  %v49 = vld [vmem:[%s0 + $0x28] sm:$0xf]
  %v50 = vld [vmem:[%s0 + $0x2c] sm:$0xf]
  %v51 = vld [vmem:[%s0 + $0x30] sm:$0xf]
  %v52 = vld [vmem:[%s0 + $0x34] sm:$0xf]
  %v53 = vld [vmem:[%s0 + $0x38] sm:$0xf]
  %v54 = vld [vmem:[%s0 + $0x3c] sm:$0xf]
  %v55 = vld [vmem:[%s1] sm:$0xf]
  %v56 = vld [vmem:[%s1 + $0x4] sm:$0xf]
  %v57 = vld [vmem:[%s1 + $0x8] sm:$0xf]
  %v58 = vld [vmem:[%s1 + $0xc] sm:$0xf]
  %v59 = vld [vmem:[%s1 + $0x10] sm:$0xf]
  %v60 = vld [vmem:[%s1 + $0x14] sm:$0xf]
  %v61 = vld [vmem:[%s1 + $0x18] sm:$0xf]
  %v62 = vld [vmem:[%s1 + $0x1c] sm:$0xf]
  %v63 = vld [vmem:[%s1 + $0x20] sm:$0xf]
  %v64 = vld [vmem:[%s1 + $0x24] sm:$0xf]
  %v65 = vld [vmem:[%s1 + $0x28] sm:$0xf]
  %v66 = vld [vmem:[%s1 + $0x2c] sm:$0xf]
  %v67 = vld [vmem:[%s1 + $0x30] sm:$0xf]
  %v68 = vld [vmem:[%s1 + $0x34] sm:$0xf]
  %v69 = vld [vmem:[%s1 + $0x38] sm:$0xf]
  %v70 = vld [vmem:[%s1 + $0x3c] sm:$0xf]
  %v71 = vld [vmem:[%s2] sm:$0xf]
  %v72 = vld [vmem:[%s2 + $0x4] sm:$0xf]
  %v73 = vld [vmem:[%s2 + $0x8] sm:$0xf]
  %v74 = vld [vmem:[%s2 + $0xc] sm:$0xf]
  %v75 = vld [vmem:[%s2 + $0x10] sm:$0xf]
  %v76 = vld [vmem:[%s2 + $0x14] sm:$0xf]
  %v77 = vld [vmem:[%s2 + $0x18] sm:$0xf]
  %v78 = vld [vmem:[%s2 + $0x1c] sm:$0xf]
  %v79 = vld [vmem:[%s2 + $0x20] sm:$0xf]
  %v80 = vld [vmem:[%s2 + $0x24] sm:$0xf]
  %v81 = vld [vmem:[%s2 + $0x28] sm:$0xf]
  %v82 = vld [vmem:[%s2 + $0x2c] sm:$0xf]
  %v83 = vld [vmem:[%s2 + $0x30] sm:$0xf]
  %v84 = vld [vmem:[%s2 + $0x34] sm:$0xf]
  %v85 = vld [vmem:[%s2 + $0x38] sm:$0xf]
  %v86 = vld [vmem:[%s2 + $0x3c] sm:$0xf]
  %v103 = vunpack.c.l.b16 %v55
  %v104 = vunpack.c.l.b16 %v56
  %v105 = vunpack.c.l.b16 %v57
  %v106 = vunpack.c.l.b16 %v58
  %v107 = vunpack.c.l.b16 %v59
  %v108 = vunpack.c.l.b16 %v60
  %v109 = vunpack.c.l.b16 %v61
  %v110 = vunpack.c.l.b16 %v62
  %v111 = vunpack.c.l.b16 %v63
  %v112 = vunpack.c.l.b16 %v64
  %v113 = vunpack.c.l.b16 %v65
  %v114 = vunpack.c.l.b16 %v66
  %v115 = vunpack.c.l.b16 %v67
  %v116 = vunpack.c.l.b16 %v68
  %v117 = vunpack.c.l.b16 %v69
  %v118 = vunpack.c.l.b16 %v70
  %v119 = vpack.c.b16 %v104, %v103
  %v120 = vpack.c.b16 %v106, %v105
  %v121 = vpack.c.b16 %v108, %v107
  %v122 = vpack.c.b16 %v110, %v109
  %v123 = vpack.c.b16 %v112, %v111
  %v124 = vpack.c.b16 %v114, %v113
  %v125 = vpack.c.b16 %v116, %v115
  %v126 = vpack.c.b16 %v118, %v117
  %v151 = vunpack.c.l.b16 %v71
  %v152 = vunpack.c.l.b16 %v72
  %v153 = vunpack.c.l.b16 %v73
  %v154 = vunpack.c.l.b16 %v74
  %v155 = vunpack.c.l.b16 %v75
  %v156 = vunpack.c.l.b16 %v76
  %v157 = vunpack.c.l.b16 %v77
  %v158 = vunpack.c.l.b16 %v78
  %v159 = vunpack.c.l.b16 %v79
  %v160 = vunpack.c.l.b16 %v80
  %v161 = vunpack.c.l.b16 %v81
  %v162 = vunpack.c.l.b16 %v82
  %v163 = vunpack.c.l.b16 %v83
  %v164 = vunpack.c.l.b16 %v84
  %v165 = vunpack.c.l.b16 %v85
  %v166 = vunpack.c.l.b16 %v86
  %v167 = vpack.c.b16 %v152, %v151
  %v168 = vpack.c.b16 %v154, %v153
  %v169 = vpack.c.b16 %v156, %v155
  %v170 = vpack.c.b16 %v158, %v157
  %v171 = vpack.c.b16 %v160, %v159
  %v172 = vpack.c.b16 %v162, %v161
  %v173 = vpack.c.b16 %v164, %v163
  %v174 = vpack.c.b16 %v166, %v165
  %183 = vmatprep.subr.bf16.mxu0 0
  %184 = vmatpush1.bf16.msra.mxu0 %v174
  %185 = vmatprep.subr.bf16.mxu0 0
  %186 = vmatpush1.bf16.msra.mxu0 %v173
  %187 = vmatprep.subr.bf16.mxu0 0
  %188 = vmatpush1.bf16.msra.mxu0 %v172
  %189 = vmatprep.subr.bf16.mxu0 0
  %190 = vmatpush1.bf16.msra.mxu0 %v171
  %191 = vmatprep.subr.bf16.mxu0 0
  %192 = vmatpush1.bf16.msra.mxu0 %v170
  %193 = vmatprep.subr.bf16.mxu0 0
  %194 = vmatpush1.bf16.msra.mxu0 %v169
  %195 = vmatprep.subr.bf16.mxu0 0
  %196 = vmatpush1.bf16.msra.mxu0 %v168
  %197 = vmatprep.subr.bf16.mxu0 0
  %198 = vmatpush1.bf16.msra.mxu0 %v167
  %199 = vmatprep.subr.bf16.mxu0 0
  %200 = vmatpush2.bf16.msra.mxu0 0
  %201 = vmatprep.subr.bf16.mxu0 0
  %202 = vmatpush2.bf16.msra.mxu0 0
  %203 = vmatprep.subr.bf16.mxu0 0
  %204 = vmatpush2.bf16.msra.mxu0 0
  %205 = vmatprep.subr.bf16.mxu0 0
  %206 = vmatpush2.bf16.msra.mxu0 0
  %207 = vmatprep.subr.bf16.mxu0 0
  %208 = vmatpush2.bf16.msra.mxu0 0
  %209 = vmatprep.subr.bf16.mxu0 0
  %210 = vmatpush2.bf16.msra.mxu0 0
  %211 = vmatprep.subr.bf16.mxu0 0
  %212 = vmatpush2.bf16.msra.mxu0 0
  %213 = vmatprep.subr.bf16.mxu0 0
  %214 = vmatpush2.bf16.msra.mxu0 0
  %215 = vmatprep.mubr.bf16.mxu0 0
  %216 = vmatmul.mubr.bf16.gmra.mxu0 %v119
  %v217 = vpop.f32.mrf.mxu0
  %v218 = vadd.f32 0.0, %v217
  %v219 = vpop.f32.mrf.mxu0
  %v220 = vpop.f32.mrf.mxu0
  %v221 = vadd.f32 0.0, %v220
  %v222 = vpop.f32.mrf.mxu0
  %223 = vmatprep.mubr.bf16.mxu0 0
  %224 = vmatmul.mubr.bf16.gmra.mxu0 %v120
  %v225 = vpop.f32.mrf.mxu0
  %v226 = vadd.f32 0.0, %v225
  %v227 = vpop.f32.mrf.mxu0
  %v228 = vpop.f32.mrf.mxu0
  %v229 = vadd.f32 0.0, %v228
  %v230 = vpop.f32.mrf.mxu0
  %231 = vmatprep.mubr.bf16.mxu0 0
  %232 = vmatmul.mubr.bf16.gmra.mxu0 %v121
  %v233 = vpop.f32.mrf.mxu0
  %v234 = vadd.f32 0.0, %v233
  %v235 = vpop.f32.mrf.mxu0
  %v236 = vpop.f32.mrf.mxu0
  %v237 = vadd.f32 0.0, %v236
  %v238 = vpop.f32.mrf.mxu0
  %239 = vmatprep.mubr.bf16.mxu0 0
  %240 = vmatmul.mubr.bf16.gmra.mxu0 %v122
  %v241 = vpop.f32.mrf.mxu0
  %v242 = vadd.f32 0.0, %v241
  %v243 = vpop.f32.mrf.mxu0
  %v244 = vpop.f32.mrf.mxu0
  %v245 = vadd.f32 0.0, %v244
  %v246 = vpop.f32.mrf.mxu0
  %247 = vmatprep.mubr.bf16.mxu0 0
  %248 = vmatmul.mubr.bf16.gmra.mxu0 %v123
  %v249 = vpop.f32.mrf.mxu0
  %v250 = vadd.f32 0.0, %v249
  %v251 = vpop.f32.mrf.mxu0
  %v252 = vpop.f32.mrf.mxu0
  %v253 = vadd.f32 0.0, %v252
  %v254 = vpop.f32.mrf.mxu0
  %255 = vmatprep.mubr.bf16.mxu0 0
  %256 = vmatmul.mubr.bf16.gmra.mxu0 %v124
  %v257 = vpop.f32.mrf.mxu0
  %v258 = vadd.f32 0.0, %v257
  %v259 = vpop.f32.mrf.mxu0
  %v260 = vpop.f32.mrf.mxu0
  %v261 = vadd.f32 0.0, %v260
  %v262 = vpop.f32.mrf.mxu0
  %263 = vmatprep.mubr.bf16.mxu0 0
  %264 = vmatmul.mubr.bf16.gmra.mxu0 %v125
  %v265 = vpop.f32.mrf.mxu0
  %v266 = vadd.f32 0.0, %v265
  %v267 = vpop.f32.mrf.mxu0
  %v268 = vpop.f32.mrf.mxu0
  %v269 = vadd.f32 0.0, %v268
  %v270 = vpop.f32.mrf.mxu0
  %271 = vmatprep.mubr.bf16.mxu0 0
  %272 = vmatmul.mubr.bf16.gmra.mxu0 %v126
  %v273 = vpop.f32.mrf.mxu0
  %v274 = vadd.f32 0.0, %v273
  %v275 = vpop.f32.mrf.mxu0
  %v276 = vpop.f32.mrf.mxu0
  %v277 = vadd.f32 0.0, %v276
  %v278 = vpop.f32.mrf.mxu0
  %279 = vdwg.mxu0
  %v280 = vpack.c.bf16 %v221, %v218
  %v281 = vpack.c.bf16 %v229, %v226
  %v282 = vpack.c.bf16 %v237, %v234
  %v283 = vpack.c.bf16 %v245, %v242
  %v284 = vpack.c.bf16 %v253, %v250
  %v285 = vpack.c.bf16 %v261, %v258
  %v286 = vpack.c.bf16 %v269, %v266
  %v287 = vpack.c.bf16 %v277, %v274
  %v288 = vld [vmem:[%s3] sm:$0x1]
  %v290 = vlaneseq
  %v291 = vshrl.u32 %v290, 7
  %v292 = vsub.s32 0, %v291
  %v293 = vrot.slane %v288, %v292
  %v311 = vunpack.c.l.b16 %v39
  %v312 = vunpack.c.l.b16 %v40
  %v313 = vunpack.c.l.b16 %v41
  %v314 = vunpack.c.l.b16 %v42
  %v315 = vunpack.c.l.b16 %v43
  %v316 = vunpack.c.l.b16 %v44
  %v317 = vunpack.c.l.b16 %v45
  %v318 = vunpack.c.l.b16 %v46
  %v319 = vunpack.c.l.b16 %v47
  %v320 = vunpack.c.l.b16 %v48
  %v321 = vunpack.c.l.b16 %v49
  %v322 = vunpack.c.l.b16 %v50
  %v323 = vunpack.c.l.b16 %v51
  %v324 = vunpack.c.l.b16 %v52
  %v325 = vunpack.c.l.b16 %v53
  %v326 = vunpack.c.l.b16 %v54
  %v327 = vpack.c.b16 %v312, %v311
  %v328 = vpack.c.b16 %v314, %v313
  %v329 = vpack.c.b16 %v316, %v315
  %v330 = vpack.c.b16 %v318, %v317
  %v331 = vpack.c.b16 %v320, %v319
  %v332 = vpack.c.b16 %v322, %v321
  %v333 = vpack.c.b16 %v324, %v323
  %v334 = vpack.c.b16 %v326, %v325
  %343 = vmatprep.subr.bf16.mxu0 0
  %344 = vmatpush1.bf16.msra.mxu0 %v287
  %345 = vmatprep.subr.bf16.mxu0 0
  %346 = vmatpush1.bf16.msra.mxu0 %v286
  %347 = vmatprep.subr.bf16.mxu0 0
  %348 = vmatpush1.bf16.msra.mxu0 %v285
  %349 = vmatprep.subr.bf16.mxu0 0
  %350 = vmatpush1.bf16.msra.mxu0 %v284
  %351 = vmatprep.subr.bf16.mxu0 0
  %352 = vmatpush1.bf16.msra.mxu0 %v283
  %353 = vmatprep.subr.bf16.mxu0 0
  %354 = vmatpush1.bf16.msra.mxu0 %v282
  %355 = vmatprep.subr.bf16.mxu0 0
  %356 = vmatpush1.bf16.msra.mxu0 %v281
  %357 = vmatprep.subr.bf16.mxu0 0
  %358 = vmatpush1.bf16.msra.mxu0 %v280
  %359 = vmatprep.subr.bf16.mxu0 0
  %360 = vmatpush2.bf16.msra.mxu0 0
  %361 = vmatprep.subr.bf16.mxu0 0
  %362 = vmatpush2.bf16.msra.mxu0 0
  %363 = vmatprep.subr.bf16.mxu0 0
  %364 = vmatpush2.bf16.msra.mxu0 0
  %365 = vmatprep.subr.bf16.mxu0 0
  %366 = vmatpush2.bf16.msra.mxu0 0
  %367 = vmatprep.subr.bf16.mxu0 0
  %368 = vmatpush2.bf16.msra.mxu0 0
  %369 = vmatprep.subr.bf16.mxu0 0
  %370 = vmatpush2.bf16.msra.mxu0 0
  %371 = vmatprep.subr.bf16.mxu0 0
  %372 = vmatpush2.bf16.msra.mxu0 0
  %373 = vmatprep.subr.bf16.mxu0 0
  %374 = vmatpush2.bf16.msra.mxu0 0
  %375 = vmatprep.mubr.bf16.mxu0 0
  %376 = vmatmul.mubr.bf16.gmra.mxu0 %v327
  %v377 = vpop.f32.mrf.mxu0
  %v378 = vadd.f32 %v293, %v377
  %v379 = vpop.f32.mrf.mxu0
  %v380 = vpop.f32.mrf.mxu0
  %v381 = vadd.f32 %v293, %v380
  %v382 = vpop.f32.mrf.mxu0
  %383 = vmatprep.mubr.bf16.mxu0 0
  %384 = vmatmul.mubr.bf16.gmra.mxu0 %v328
  %v385 = vpop.f32.mrf.mxu0
  %v386 = vadd.f32 %v293, %v385
  %v387 = vpop.f32.mrf.mxu0
  %v388 = vpop.f32.mrf.mxu0
  %v389 = vadd.f32 %v293, %v388
  %v390 = vpop.f32.mrf.mxu0
  %391 = vmatprep.mubr.bf16.mxu0 0
  %392 = vmatmul.mubr.bf16.gmra.mxu0 %v329
  %v393 = vpop.f32.mrf.mxu0
  %v394 = vadd.f32 %v293, %v393
  %v395 = vpop.f32.mrf.mxu0
  %v396 = vpop.f32.mrf.mxu0
  %v397 = vadd.f32 %v293, %v396
  %v398 = vpop.f32.mrf.mxu0
  %399 = vmatprep.mubr.bf16.mxu0 0
  %400 = vmatmul.mubr.bf16.gmra.mxu0 %v330
  %v401 = vpop.f32.mrf.mxu0
  %v402 = vadd.f32 %v293, %v401
  %v403 = vpop.f32.mrf.mxu0
  %v404 = vpop.f32.mrf.mxu0
  %v405 = vadd.f32 %v293, %v404
  %v406 = vpop.f32.mrf.mxu0
  %407 = vmatprep.mubr.bf16.mxu0 0
  %408 = vmatmul.mubr.bf16.gmra.mxu0 %v331
  %v409 = vpop.f32.mrf.mxu0
  %v410 = vadd.f32 %v293, %v409
  %v411 = vpop.f32.mrf.mxu0
  %v412 = vpop.f32.mrf.mxu0
  %v413 = vadd.f32 %v293, %v412
  %v414 = vpop.f32.mrf.mxu0
  %415 = vmatprep.mubr.bf16.mxu0 0
  %416 = vmatmul.mubr.bf16.gmra.mxu0 %v332
  %v417 = vpop.f32.mrf.mxu0
  %v418 = vadd.f32 %v293, %v417
  %v419 = vpop.f32.mrf.mxu0
  %v420 = vpop.f32.mrf.mxu0
  %v421 = vadd.f32 %v293, %v420
  %v422 = vpop.f32.mrf.mxu0
  %423 = vmatprep.mubr.bf16.mxu0 0
  %424 = vmatmul.mubr.bf16.gmra.mxu0 %v333
  %v425 = vpop.f32.mrf.mxu0
  %v426 = vadd.f32 %v293, %v425
  %v427 = vpop.f32.mrf.mxu0
  %v428 = vpop.f32.mrf.mxu0
  %v429 = vadd.f32 %v293, %v428
  %v430 = vpop.f32.mrf.mxu0
  %431 = vmatprep.mubr.bf16.mxu0 0
  %432 = vmatmul.mubr.bf16.gmra.mxu0 %v334
  %v433 = vpop.f32.mrf.mxu0
  %v434 = vadd.f32 %v293, %v433
  %v435 = vpop.f32.mrf.mxu0
  %v436 = vpop.f32.mrf.mxu0
  %v437 = vadd.f32 %v293, %v436
  %v438 = vpop.f32.mrf.mxu0
  %439 = vdwg.mxu0
  %v440 = vmax.f32 %v378, 0.0
  %v441 = vmax.f32 %v381, 0.0
  %v442 = vmax.f32 %v386, 0.0
  %v443 = vmax.f32 %v389, 0.0
  %v444 = vmax.f32 %v394, 0.0
  %v445 = vmax.f32 %v397, 0.0
  %v446 = vmax.f32 %v402, 0.0
  %v447 = vmax.f32 %v405, 0.0
  %v448 = vmax.f32 %v410, 0.0
  %v449 = vmax.f32 %v413, 0.0
  %v450 = vmax.f32 %v418, 0.0
  %v451 = vmax.f32 %v421, 0.0
  %v452 = vmax.f32 %v426, 0.0
  %v453 = vmax.f32 %v429, 0.0
  %v454 = vmax.f32 %v434, 0.0
  %v455 = vmax.f32 %v437, 0.0
  %v456 = vpack.c.bf16 %v441, %v440
  %v457 = vpack.c.bf16 %v443, %v442
  %v458 = vpack.c.bf16 %v445, %v444
  %v459 = vpack.c.bf16 %v447, %v446
  %v460 = vpack.c.bf16 %v449, %v448
  %v461 = vpack.c.bf16 %v451, %v450
  %v462 = vpack.c.bf16 %v453, %v452
  %v463 = vpack.c.bf16 %v455, %v454
  %s464 = scalar_lea.vmem %s2, 64
  %v465 = vld [vmem:[%s464] sm:$0xf]
  %v466 = vld [vmem:[%s464 + $0x4] sm:$0xf]
  %v467 = vld [vmem:[%s464 + $0x8] sm:$0xf]
  %v468 = vld [vmem:[%s464 + $0xc] sm:$0xf]
  %v469 = vld [vmem:[%s464 + $0x10] sm:$0xf]
  %v470 = vld [vmem:[%s464 + $0x14] sm:$0xf]
  %v471 = vld [vmem:[%s464 + $0x18] sm:$0xf]
  %v472 = vld [vmem:[%s464 + $0x1c] sm:$0xf]
  %v473 = vld [vmem:[%s464 + $0x20] sm:$0xf]
  %v474 = vld [vmem:[%s464 + $0x24] sm:$0xf]
  %v475 = vld [vmem:[%s464 + $0x28] sm:$0xf]
  %v476 = vld [vmem:[%s464 + $0x2c] sm:$0xf]
  %v477 = vld [vmem:[%s464 + $0x30] sm:$0xf]
  %v478 = vld [vmem:[%s464 + $0x34] sm:$0xf]
  %v479 = vld [vmem:[%s464 + $0x38] sm:$0xf]
  %v480 = vld [vmem:[%s464 + $0x3c] sm:$0xf]
  %v497 = vunpack.c.l.b16 %v465
  %v498 = vunpack.c.l.b16 %v466
  %v499 = vunpack.c.l.b16 %v467
  %v500 = vunpack.c.l.b16 %v468
  %v501 = vunpack.c.l.b16 %v469
  %v502 = vunpack.c.l.b16 %v470
  %v503 = vunpack.c.l.b16 %v471
  %v504 = vunpack.c.l.b16 %v472
  %v505 = vunpack.c.l.b16 %v473
  %v506 = vunpack.c.l.b16 %v474
  %v507 = vunpack.c.l.b16 %v475
  %v508 = vunpack.c.l.b16 %v476
  %v509 = vunpack.c.l.b16 %v477
  %v510 = vunpack.c.l.b16 %v478
  %v511 = vunpack.c.l.b16 %v479
  %v512 = vunpack.c.l.b16 %v480
  %v513 = vpack.c.b16 %v498, %v497
  %v514 = vpack.c.b16 %v500, %v499
  %v515 = vpack.c.b16 %v502, %v501
  %v516 = vpack.c.b16 %v504, %v503
  %v517 = vpack.c.b16 %v506, %v505
  %v518 = vpack.c.b16 %v508, %v507
  %v519 = vpack.c.b16 %v510, %v509
  %v520 = vpack.c.b16 %v512, %v511
  %529 = vmatprep.subr.bf16.mxu0 0
  %530 = vmatpush1.bf16.msra.mxu0 %v520
  %531 = vmatprep.subr.bf16.mxu0 0
  %532 = vmatpush1.bf16.msra.mxu0 %v519
  %533 = vmatprep.subr.bf16.mxu0 0
  %534 = vmatpush1.bf16.msra.mxu0 %v518
  %535 = vmatprep.subr.bf16.mxu0 0
  %536 = vmatpush1.bf16.msra.mxu0 %v517
  %537 = vmatprep.subr.bf16.mxu0 0
  %538 = vmatpush1.bf16.msra.mxu0 %v516
  %539 = vmatprep.subr.bf16.mxu0 0
  %540 = vmatpush1.bf16.msra.mxu0 %v515
  %541 = vmatprep.subr.bf16.mxu0 0
  %542 = vmatpush1.bf16.msra.mxu0 %v514
  %543 = vmatprep.subr.bf16.mxu0 0
  %544 = vmatpush1.bf16.msra.mxu0 %v513
  %545 = vmatprep.subr.bf16.mxu0 0
  %546 = vmatpush2.bf16.msra.mxu0 0
  %547 = vmatprep.subr.bf16.mxu0 0
  %548 = vmatpush2.bf16.msra.mxu0 0
  %549 = vmatprep.subr.bf16.mxu0 0
  %550 = vmatpush2.bf16.msra.mxu0 0
  %551 = vmatprep.subr.bf16.mxu0 0
  %552 = vmatpush2.bf16.msra.mxu0 0
  %553 = vmatprep.subr.bf16.mxu0 0
  %554 = vmatpush2.bf16.msra.mxu0 0
  %555 = vmatprep.subr.bf16.mxu0 0
  %556 = vmatpush2.bf16.msra.mxu0 0
  %557 = vmatprep.subr.bf16.mxu0 0
  %558 = vmatpush2.bf16.msra.mxu0 0
  %559 = vmatprep.subr.bf16.mxu0 0
  %560 = vmatpush2.bf16.msra.mxu0 0
  %561 = vmatprep.mubr.bf16.mxu0 0
  %562 = vmatmul.mubr.bf16.gmra.mxu0 %v456
  %v563 = vpop.f32.mrf.mxu0
  %v564 = vadd.f32 0.0, %v563
  %v565 = vpop.f32.mrf.mxu0
  %v566 = vpop.f32.mrf.mxu0
  %v567 = vadd.f32 0.0, %v566
  %v568 = vpop.f32.mrf.mxu0
  %569 = vmatprep.mubr.bf16.mxu0 0
  %570 = vmatmul.mubr.bf16.gmra.mxu0 %v457
  %v571 = vpop.f32.mrf.mxu0
  %v572 = vadd.f32 0.0, %v571
  %v573 = vpop.f32.mrf.mxu0
  %v574 = vpop.f32.mrf.mxu0
  %v575 = vadd.f32 0.0, %v574
  %v576 = vpop.f32.mrf.mxu0
  %577 = vmatprep.mubr.bf16.mxu0 0
  %578 = vmatmul.mubr.bf16.gmra.mxu0 %v458
  %v579 = vpop.f32.mrf.mxu0
  %v580 = vadd.f32 0.0, %v579
  %v581 = vpop.f32.mrf.mxu0
  %v582 = vpop.f32.mrf.mxu0
  %v583 = vadd.f32 0.0, %v582
  %v584 = vpop.f32.mrf.mxu0
  %585 = vmatprep.mubr.bf16.mxu0 0
  %586 = vmatmul.mubr.bf16.gmra.mxu0 %v459
  %v587 = vpop.f32.mrf.mxu0
  %v588 = vadd.f32 0.0, %v587
  %v589 = vpop.f32.mrf.mxu0
  %v590 = vpop.f32.mrf.mxu0
  %v591 = vadd.f32 0.0, %v590
  %v592 = vpop.f32.mrf.mxu0
  %593 = vmatprep.mubr.bf16.mxu0 0
  %594 = vmatmul.mubr.bf16.gmra.mxu0 %v460
  %v595 = vpop.f32.mrf.mxu0
  %v596 = vadd.f32 0.0, %v595
  %v597 = vpop.f32.mrf.mxu0
  %v598 = vpop.f32.mrf.mxu0
  %v599 = vadd.f32 0.0, %v598
  %v600 = vpop.f32.mrf.mxu0
  %601 = vmatprep.mubr.bf16.mxu0 0
  %602 = vmatmul.mubr.bf16.gmra.mxu0 %v461
  %v603 = vpop.f32.mrf.mxu0
  %v604 = vadd.f32 0.0, %v603
  %v605 = vpop.f32.mrf.mxu0
  %v606 = vpop.f32.mrf.mxu0
  %v607 = vadd.f32 0.0, %v606
  %v608 = vpop.f32.mrf.mxu0
  %609 = vmatprep.mubr.bf16.mxu0 0
  %610 = vmatmul.mubr.bf16.gmra.mxu0 %v462
  %v611 = vpop.f32.mrf.mxu0
  %v612 = vadd.f32 0.0, %v611
  %v613 = vpop.f32.mrf.mxu0
  %v614 = vpop.f32.mrf.mxu0
  %v615 = vadd.f32 0.0, %v614
  %v616 = vpop.f32.mrf.mxu0
  %617 = vmatprep.mubr.bf16.mxu0 0
  %618 = vmatmul.mubr.bf16.gmra.mxu0 %v463
  %v619 = vpop.f32.mrf.mxu0
  %v620 = vadd.f32 0.0, %v619
  %v621 = vpop.f32.mrf.mxu0
  %v622 = vpop.f32.mrf.mxu0
  %v623 = vadd.f32 0.0, %v622
  %v624 = vpop.f32.mrf.mxu0
  %625 = vdwg.mxu0
  %v626 = vpack.c.bf16 %v567, %v564
  %v627 = vpack.c.bf16 %v575, %v572
  %v628 = vpack.c.bf16 %v583, %v580
  %v629 = vpack.c.bf16 %v591, %v588
  %v630 = vpack.c.bf16 %v599, %v596
  %v631 = vpack.c.bf16 %v607, %v604
  %v632 = vpack.c.bf16 %v615, %v612
  %v633 = vpack.c.bf16 %v623, %v620
  %s634 = scalar_lea.vmem %s3, 1
  %v635 = vld [vmem:[%s634] sm:$0x1]
  %v637 = vlaneseq
  %v638 = vshrl.u32 %v637, 7
  %v639 = vsub.s32 0, %v638
  %v640 = vrot.slane %v635, %v639
  %642 = vmatprep.subr.bf16.mxu0 0
  %643 = vmatpush1.bf16.msra.mxu0 %v633
  %644 = vmatprep.subr.bf16.mxu0 0
  %645 = vmatpush1.bf16.msra.mxu0 %v632
  %646 = vmatprep.subr.bf16.mxu0 0
  %647 = vmatpush1.bf16.msra.mxu0 %v631
  %648 = vmatprep.subr.bf16.mxu0 0
  %649 = vmatpush1.bf16.msra.mxu0 %v630
  %650 = vmatprep.subr.bf16.mxu0 0
  %651 = vmatpush1.bf16.msra.mxu0 %v629
  %652 = vmatprep.subr.bf16.mxu0 0
  %653 = vmatpush1.bf16.msra.mxu0 %v628
  %654 = vmatprep.subr.bf16.mxu0 0
  %655 = vmatpush1.bf16.msra.mxu0 %v627
  %656 = vmatprep.subr.bf16.mxu0 0
  %657 = vmatpush1.bf16.msra.mxu0 %v626
  %658 = vmatprep.subr.bf16.mxu0 0
  %659 = vmatpush2.bf16.msra.mxu0 0
  %660 = vmatprep.subr.bf16.mxu0 0
  %661 = vmatpush2.bf16.msra.mxu0 0
  %662 = vmatprep.subr.bf16.mxu0 0
  %663 = vmatpush2.bf16.msra.mxu0 0
  %664 = vmatprep.subr.bf16.mxu0 0
  %665 = vmatpush2.bf16.msra.mxu0 0
  %666 = vmatprep.subr.bf16.mxu0 0
  %667 = vmatpush2.bf16.msra.mxu0 0
  %668 = vmatprep.subr.bf16.mxu0 0
  %669 = vmatpush2.bf16.msra.mxu0 0
  %670 = vmatprep.subr.bf16.mxu0 0
  %671 = vmatpush2.bf16.msra.mxu0 0
  %672 = vmatprep.subr.bf16.mxu0 0
  %673 = vmatpush2.bf16.msra.mxu0 0
  %674 = vmatprep.mubr.bf16.mxu0 0
  %675 = vmatmul.mubr.bf16.gmra.mxu0 %v327
  %v676 = vpop.f32.mrf.mxu0
  %v677 = vadd.f32 %v640, %v676
  %v678 = vpop.f32.mrf.mxu0
  %v679 = vpop.f32.mrf.mxu0
  %v680 = vadd.f32 %v640, %v679
  %v681 = vpop.f32.mrf.mxu0
  %682 = vmatprep.mubr.bf16.mxu0 0
  %683 = vmatmul.mubr.bf16.gmra.mxu0 %v328
  %v684 = vpop.f32.mrf.mxu0
  %v685 = vadd.f32 %v640, %v684
  %v686 = vpop.f32.mrf.mxu0
  %v687 = vpop.f32.mrf.mxu0
  %v688 = vadd.f32 %v640, %v687
  %v689 = vpop.f32.mrf.mxu0
  %690 = vmatprep.mubr.bf16.mxu0 0
  %691 = vmatmul.mubr.bf16.gmra.mxu0 %v329
  %v692 = vpop.f32.mrf.mxu0
  %v693 = vadd.f32 %v640, %v692
  %v694 = vpop.f32.mrf.mxu0
  %v695 = vpop.f32.mrf.mxu0
  %v696 = vadd.f32 %v640, %v695
  %v697 = vpop.f32.mrf.mxu0
  %698 = vmatprep.mubr.bf16.mxu0 0
  %699 = vmatmul.mubr.bf16.gmra.mxu0 %v330
  %v700 = vpop.f32.mrf.mxu0
  %v701 = vadd.f32 %v640, %v700
  %v702 = vpop.f32.mrf.mxu0
  %v703 = vpop.f32.mrf.mxu0
  %v704 = vadd.f32 %v640, %v703
  %v705 = vpop.f32.mrf.mxu0
  %706 = vmatprep.mubr.bf16.mxu0 0
  %707 = vmatmul.mubr.bf16.gmra.mxu0 %v331
  %v708 = vpop.f32.mrf.mxu0
  %v709 = vadd.f32 %v640, %v708
  %v710 = vpop.f32.mrf.mxu0
  %v711 = vpop.f32.mrf.mxu0
  %v712 = vadd.f32 %v640, %v711
  %v713 = vpop.f32.mrf.mxu0
  %714 = vmatprep.mubr.bf16.mxu0 0
  %715 = vmatmul.mubr.bf16.gmra.mxu0 %v332
  %v716 = vpop.f32.mrf.mxu0
  %v717 = vadd.f32 %v640, %v716
  %v718 = vpop.f32.mrf.mxu0
  %v719 = vpop.f32.mrf.mxu0
  %v720 = vadd.f32 %v640, %v719
  %v721 = vpop.f32.mrf.mxu0
  %722 = vmatprep.mubr.bf16.mxu0 0
  %723 = vmatmul.mubr.bf16.gmra.mxu0 %v333
  %v724 = vpop.f32.mrf.mxu0
  %v725 = vadd.f32 %v640, %v724
  %v726 = vpop.f32.mrf.mxu0
  %v727 = vpop.f32.mrf.mxu0
  %v728 = vadd.f32 %v640, %v727
  %v729 = vpop.f32.mrf.mxu0
  %730 = vmatprep.mubr.bf16.mxu0 0
  %731 = vmatmul.mubr.bf16.gmra.mxu0 %v334
  %v732 = vpop.f32.mrf.mxu0
  %v733 = vadd.f32 %v640, %v732
  %v734 = vpop.f32.mrf.mxu0
  %v735 = vpop.f32.mrf.mxu0
  %v736 = vadd.f32 %v640, %v735
  %v737 = vpop.f32.mrf.mxu0
  %738 = vdwg.mxu0
  %v739 = vmax.f32 %v677, 0.0
  %v740 = vmax.f32 %v680, 0.0
  %v741 = vmax.f32 %v685, 0.0
  %v742 = vmax.f32 %v688, 0.0
  %v743 = vmax.f32 %v693, 0.0
  %v744 = vmax.f32 %v696, 0.0
  %v745 = vmax.f32 %v701, 0.0
  %v746 = vmax.f32 %v704, 0.0
  %v747 = vmax.f32 %v709, 0.0
  %v748 = vmax.f32 %v712, 0.0
  %v749 = vmax.f32 %v717, 0.0
  %v750 = vmax.f32 %v720, 0.0
  %v751 = vmax.f32 %v725, 0.0
  %v752 = vmax.f32 %v728, 0.0
  %v753 = vmax.f32 %v733, 0.0
  %v754 = vmax.f32 %v736, 0.0
  %v755 = vpack.c.bf16 %v740, %v739
  %v756 = vpack.c.bf16 %v742, %v741
  %v757 = vpack.c.bf16 %v744, %v743
  %v758 = vpack.c.bf16 %v746, %v745
  %v759 = vpack.c.bf16 %v748, %v747
  %v760 = vpack.c.bf16 %v750, %v749
  %v761 = vpack.c.bf16 %v752, %v751
  %v762 = vpack.c.bf16 %v754, %v753
  %s763 = scalar_lea.vmem %s2, 128
  %v764 = vld [vmem:[%s763] sm:$0xf]
  %v765 = vld [vmem:[%s763 + $0x4] sm:$0xf]
  %v766 = vld [vmem:[%s763 + $0x8] sm:$0xf]
  %v767 = vld [vmem:[%s763 + $0xc] sm:$0xf]
  %v768 = vld [vmem:[%s763 + $0x10] sm:$0xf]
  %v769 = vld [vmem:[%s763 + $0x14] sm:$0xf]
  %v770 = vld [vmem:[%s763 + $0x18] sm:$0xf]
  %v771 = vld [vmem:[%s763 + $0x1c] sm:$0xf]
  %v772 = vld [vmem:[%s763 + $0x20] sm:$0xf]
  %v773 = vld [vmem:[%s763 + $0x24] sm:$0xf]
  %v774 = vld [vmem:[%s763 + $0x28] sm:$0xf]
  %v775 = vld [vmem:[%s763 + $0x2c] sm:$0xf]
  %v776 = vld [vmem:[%s763 + $0x30] sm:$0xf]
  %v777 = vld [vmem:[%s763 + $0x34] sm:$0xf]
  %v778 = vld [vmem:[%s763 + $0x38] sm:$0xf]
  %v779 = vld [vmem:[%s763 + $0x3c] sm:$0xf]
  %v796 = vunpack.c.l.b16 %v764
  %v797 = vunpack.c.l.b16 %v765
  %v798 = vunpack.c.l.b16 %v766
  %v799 = vunpack.c.l.b16 %v767
  %v800 = vunpack.c.l.b16 %v768
  %v801 = vunpack.c.l.b16 %v769
  %v802 = vunpack.c.l.b16 %v770
  %v803 = vunpack.c.l.b16 %v771
  %v804 = vunpack.c.l.b16 %v772
  %v805 = vunpack.c.l.b16 %v773
  %v806 = vunpack.c.l.b16 %v774
  %v807 = vunpack.c.l.b16 %v775
  %v808 = vunpack.c.l.b16 %v776
  %v809 = vunpack.c.l.b16 %v777
  %v810 = vunpack.c.l.b16 %v778
  %v811 = vunpack.c.l.b16 %v779
  %v812 = vpack.c.b16 %v797, %v796
  %v813 = vpack.c.b16 %v799, %v798
  %v814 = vpack.c.b16 %v801, %v800
  %v815 = vpack.c.b16 %v803, %v802
  %v816 = vpack.c.b16 %v805, %v804
  %v817 = vpack.c.b16 %v807, %v806
  %v818 = vpack.c.b16 %v809, %v808
  %v819 = vpack.c.b16 %v811, %v810
  %828 = vmatprep.subr.bf16.mxu0 0
  %829 = vmatpush1.bf16.msra.mxu0 %v819
  %830 = vmatprep.subr.bf16.mxu0 0
  %831 = vmatpush1.bf16.msra.mxu0 %v818
  %832 = vmatprep.subr.bf16.mxu0 0
  %833 = vmatpush1.bf16.msra.mxu0 %v817
  %834 = vmatprep.subr.bf16.mxu0 0
  %835 = vmatpush1.bf16.msra.mxu0 %v816
  %836 = vmatprep.subr.bf16.mxu0 0
  %837 = vmatpush1.bf16.msra.mxu0 %v815
  %838 = vmatprep.subr.bf16.mxu0 0
  %839 = vmatpush1.bf16.msra.mxu0 %v814
  %840 = vmatprep.subr.bf16.mxu0 0
  %841 = vmatpush1.bf16.msra.mxu0 %v813
  %842 = vmatprep.subr.bf16.mxu0 0
  %843 = vmatpush1.bf16.msra.mxu0 %v812
  %844 = vmatprep.subr.bf16.mxu0 0
  %845 = vmatpush2.bf16.msra.mxu0 0
  %846 = vmatprep.subr.bf16.mxu0 0
  %847 = vmatpush2.bf16.msra.mxu0 0
  %848 = vmatprep.subr.bf16.mxu0 0
  %849 = vmatpush2.bf16.msra.mxu0 0
  %850 = vmatprep.subr.bf16.mxu0 0
  %851 = vmatpush2.bf16.msra.mxu0 0
  %852 = vmatprep.subr.bf16.mxu0 0
  %853 = vmatpush2.bf16.msra.mxu0 0
  %854 = vmatprep.subr.bf16.mxu0 0
  %855 = vmatpush2.bf16.msra.mxu0 0
  %856 = vmatprep.subr.bf16.mxu0 0
  %857 = vmatpush2.bf16.msra.mxu0 0
  %858 = vmatprep.subr.bf16.mxu0 0
  %859 = vmatpush2.bf16.msra.mxu0 0
  %860 = vmatprep.mubr.bf16.mxu0 0
  %861 = vmatmul.mubr.bf16.gmra.mxu0 %v755
  %v862 = vpop.f32.mrf.mxu0
  %v863 = vadd.f32 0.0, %v862
  %v864 = vpop.f32.mrf.mxu0
  %v865 = vpop.f32.mrf.mxu0
  %v866 = vadd.f32 0.0, %v865
  %v867 = vpop.f32.mrf.mxu0
  %868 = vmatprep.mubr.bf16.mxu0 0
  %869 = vmatmul.mubr.bf16.gmra.mxu0 %v756
  %v870 = vpop.f32.mrf.mxu0
  %v871 = vadd.f32 0.0, %v870
  %v872 = vpop.f32.mrf.mxu0
  %v873 = vpop.f32.mrf.mxu0
  %v874 = vadd.f32 0.0, %v873
  %v875 = vpop.f32.mrf.mxu0
  %876 = vmatprep.mubr.bf16.mxu0 0
  %877 = vmatmul.mubr.bf16.gmra.mxu0 %v757
  %v878 = vpop.f32.mrf.mxu0
  %v879 = vadd.f32 0.0, %v878
  %v880 = vpop.f32.mrf.mxu0
  %v881 = vpop.f32.mrf.mxu0
  %v882 = vadd.f32 0.0, %v881
  %v883 = vpop.f32.mrf.mxu0
  %884 = vmatprep.mubr.bf16.mxu0 0
  %885 = vmatmul.mubr.bf16.gmra.mxu0 %v758
  %v886 = vpop.f32.mrf.mxu0
  %v887 = vadd.f32 0.0, %v886
  %v888 = vpop.f32.mrf.mxu0
  %v889 = vpop.f32.mrf.mxu0
  %v890 = vadd.f32 0.0, %v889
  %v891 = vpop.f32.mrf.mxu0
  %892 = vmatprep.mubr.bf16.mxu0 0
  %893 = vmatmul.mubr.bf16.gmra.mxu0 %v759
  %v894 = vpop.f32.mrf.mxu0
  %v895 = vadd.f32 0.0, %v894
  %v896 = vpop.f32.mrf.mxu0
  %v897 = vpop.f32.mrf.mxu0
  %v898 = vadd.f32 0.0, %v897
  %v899 = vpop.f32.mrf.mxu0
  %900 = vmatprep.mubr.bf16.mxu0 0
  %901 = vmatmul.mubr.bf16.gmra.mxu0 %v760
  %v902 = vpop.f32.mrf.mxu0
  %v903 = vadd.f32 0.0, %v902
  %v904 = vpop.f32.mrf.mxu0
  %v905 = vpop.f32.mrf.mxu0
  %v906 = vadd.f32 0.0, %v905
  %v907 = vpop.f32.mrf.mxu0
  %908 = vmatprep.mubr.bf16.mxu0 0
  %909 = vmatmul.mubr.bf16.gmra.mxu0 %v761
  %v910 = vpop.f32.mrf.mxu0
  %v911 = vadd.f32 0.0, %v910
  %v912 = vpop.f32.mrf.mxu0
  %v913 = vpop.f32.mrf.mxu0
  %v914 = vadd.f32 0.0, %v913
  %v915 = vpop.f32.mrf.mxu0
  %916 = vmatprep.mubr.bf16.mxu0 0
  %917 = vmatmul.mubr.bf16.gmra.mxu0 %v762
  %v918 = vpop.f32.mrf.mxu0
  %v919 = vadd.f32 0.0, %v918
  %v920 = vpop.f32.mrf.mxu0
  %v921 = vpop.f32.mrf.mxu0
  %v922 = vadd.f32 0.0, %v921
  %v923 = vpop.f32.mrf.mxu0
  %924 = vdwg.mxu0
  %v925 = vpack.c.bf16 %v866, %v863
  %v926 = vpack.c.bf16 %v874, %v871
  %v927 = vpack.c.bf16 %v882, %v879
  %v928 = vpack.c.bf16 %v890, %v887
  %v929 = vpack.c.bf16 %v898, %v895
  %v930 = vpack.c.bf16 %v906, %v903
  %v931 = vpack.c.bf16 %v914, %v911
  %v932 = vpack.c.bf16 %v922, %v919
  %s933 = scalar_lea.vmem %s3, 2
  %v934 = vld [vmem:[%s933] sm:$0x1]
  %v936 = vlaneseq
  %v937 = vshrl.u32 %v936, 7
  %v938 = vsub.s32 0, %v937
  %v939 = vrot.slane %v934, %v938
  %941 = vmatprep.subr.bf16.mxu0 0
  %942 = vmatpush1.bf16.msra.mxu0 %v932
  %943 = vmatprep.subr.bf16.mxu0 0
  %944 = vmatpush1.bf16.msra.mxu0 %v931
  %945 = vmatprep.subr.bf16.mxu0 0
  %946 = vmatpush1.bf16.msra.mxu0 %v930
  %947 = vmatprep.subr.bf16.mxu0 0
  %948 = vmatpush1.bf16.msra.mxu0 %v929
  %949 = vmatprep.subr.bf16.mxu0 0
  %950 = vmatpush1.bf16.msra.mxu0 %v928
  %951 = vmatprep.subr.bf16.mxu0 0
  %952 = vmatpush1.bf16.msra.mxu0 %v927
  %953 = vmatprep.subr.bf16.mxu0 0
  %954 = vmatpush1.bf16.msra.mxu0 %v926
  %955 = vmatprep.subr.bf16.mxu0 0
  %956 = vmatpush1.bf16.msra.mxu0 %v925
  %957 = vmatprep.subr.bf16.mxu0 0
  %958 = vmatpush2.bf16.msra.mxu0 0
  %959 = vmatprep.subr.bf16.mxu0 0
  %960 = vmatpush2.bf16.msra.mxu0 0
  %961 = vmatprep.subr.bf16.mxu0 0
  %962 = vmatpush2.bf16.msra.mxu0 0
  %963 = vmatprep.subr.bf16.mxu0 0
  %964 = vmatpush2.bf16.msra.mxu0 0
  %965 = vmatprep.subr.bf16.mxu0 0
  %966 = vmatpush2.bf16.msra.mxu0 0
  %967 = vmatprep.subr.bf16.mxu0 0
  %968 = vmatpush2.bf16.msra.mxu0 0
  %969 = vmatprep.subr.bf16.mxu0 0
  %970 = vmatpush2.bf16.msra.mxu0 0
  %971 = vmatprep.subr.bf16.mxu0 0
  %972 = vmatpush2.bf16.msra.mxu0 0
  %973 = vmatprep.mubr.bf16.mxu0 0
  %974 = vmatmul.mubr.bf16.gmra.mxu0 %v327
  %v975 = vpop.f32.mrf.mxu0
  %v976 = vadd.f32 %v939, %v975
  %v977 = vpop.f32.mrf.mxu0
  %v978 = vpop.f32.mrf.mxu0
  %v979 = vadd.f32 %v939, %v978
  %v980 = vpop.f32.mrf.mxu0
  %981 = vmatprep.mubr.bf16.mxu0 0
  %982 = vmatmul.mubr.bf16.gmra.mxu0 %v328
  %v983 = vpop.f32.mrf.mxu0
  %v984 = vadd.f32 %v939, %v983
  %v985 = vpop.f32.mrf.mxu0
  %v986 = vpop.f32.mrf.mxu0
  %v987 = vadd.f32 %v939, %v986
  %v988 = vpop.f32.mrf.mxu0
  %989 = vmatprep.mubr.bf16.mxu0 0
  %990 = vmatmul.mubr.bf16.gmra.mxu0 %v329
  %v991 = vpop.f32.mrf.mxu0
  %v992 = vadd.f32 %v939, %v991
  %v993 = vpop.f32.mrf.mxu0
  %v994 = vpop.f32.mrf.mxu0
  %v995 = vadd.f32 %v939, %v994
  %v996 = vpop.f32.mrf.mxu0
  %997 = vmatprep.mubr.bf16.mxu0 0
  %998 = vmatmul.mubr.bf16.gmra.mxu0 %v330
  %v999 = vpop.f32.mrf.mxu0
  %v1000 = vadd.f32 %v939, %v999
  %v1001 = vpop.f32.mrf.mxu0
  %v1002 = vpop.f32.mrf.mxu0
  %v1003 = vadd.f32 %v939, %v1002
  %v1004 = vpop.f32.mrf.mxu0
  %1005 = vmatprep.mubr.bf16.mxu0 0
  %1006 = vmatmul.mubr.bf16.gmra.mxu0 %v331
  %v1007 = vpop.f32.mrf.mxu0
  %v1008 = vadd.f32 %v939, %v1007
  %v1009 = vpop.f32.mrf.mxu0
  %v1010 = vpop.f32.mrf.mxu0
  %v1011 = vadd.f32 %v939, %v1010
  %v1012 = vpop.f32.mrf.mxu0
  %1013 = vmatprep.mubr.bf16.mxu0 0
  %1014 = vmatmul.mubr.bf16.gmra.mxu0 %v332
  %v1015 = vpop.f32.mrf.mxu0
  %v1016 = vadd.f32 %v939, %v1015
  %v1017 = vpop.f32.mrf.mxu0
  %v1018 = vpop.f32.mrf.mxu0
  %v1019 = vadd.f32 %v939, %v1018
  %v1020 = vpop.f32.mrf.mxu0
  %1021 = vmatprep.mubr.bf16.mxu0 0
  %1022 = vmatmul.mubr.bf16.gmra.mxu0 %v333
  %v1023 = vpop.f32.mrf.mxu0
  %v1024 = vadd.f32 %v939, %v1023
  %v1025 = vpop.f32.mrf.mxu0
  %v1026 = vpop.f32.mrf.mxu0
  %v1027 = vadd.f32 %v939, %v1026
  %v1028 = vpop.f32.mrf.mxu0
  %1029 = vmatprep.mubr.bf16.mxu0 0
  %1030 = vmatmul.mubr.bf16.gmra.mxu0 %v334
  %v1031 = vpop.f32.mrf.mxu0
  %v1032 = vadd.f32 %v939, %v1031
  %v1033 = vpop.f32.mrf.mxu0
  %v1034 = vpop.f32.mrf.mxu0
  %v1035 = vadd.f32 %v939, %v1034
  %v1036 = vpop.f32.mrf.mxu0
  %1037 = vdwg.mxu0
  %v1038 = vmax.f32 %v976, 0.0
  %v1039 = vmax.f32 %v979, 0.0
  %v1040 = vmax.f32 %v984, 0.0
  %v1041 = vmax.f32 %v987, 0.0
  %v1042 = vmax.f32 %v992, 0.0
  %v1043 = vmax.f32 %v995, 0.0
  %v1044 = vmax.f32 %v1000, 0.0
  %v1045 = vmax.f32 %v1003, 0.0
  %v1046 = vmax.f32 %v1008, 0.0
  %v1047 = vmax.f32 %v1011, 0.0
  %v1048 = vmax.f32 %v1016, 0.0
  %v1049 = vmax.f32 %v1019, 0.0
  %v1050 = vmax.f32 %v1024, 0.0
  %v1051 = vmax.f32 %v1027, 0.0
  %v1052 = vmax.f32 %v1032, 0.0
  %v1053 = vmax.f32 %v1035, 0.0
  %v1054 = vpack.c.bf16 %v1039, %v1038
  %v1055 = vpack.c.bf16 %v1041, %v1040
  %v1056 = vpack.c.bf16 %v1043, %v1042
  %v1057 = vpack.c.bf16 %v1045, %v1044
  %v1058 = vpack.c.bf16 %v1047, %v1046
  %v1059 = vpack.c.bf16 %v1049, %v1048
  %v1060 = vpack.c.bf16 %v1051, %v1050
  %v1061 = vpack.c.bf16 %v1053, %v1052
  %s1062 = scalar_lea.vmem %s2, 192
  %v1063 = vld [vmem:[%s1062] sm:$0xf]
  %v1064 = vld [vmem:[%s1062 + $0x4] sm:$0xf]
  %v1065 = vld [vmem:[%s1062 + $0x8] sm:$0xf]
  %v1066 = vld [vmem:[%s1062 + $0xc] sm:$0xf]
  %v1067 = vld [vmem:[%s1062 + $0x10] sm:$0xf]
  %v1068 = vld [vmem:[%s1062 + $0x14] sm:$0xf]
  %v1069 = vld [vmem:[%s1062 + $0x18] sm:$0xf]
  %v1070 = vld [vmem:[%s1062 + $0x1c] sm:$0xf]
  %v1071 = vld [vmem:[%s1062 + $0x20] sm:$0xf]
  %v1072 = vld [vmem:[%s1062 + $0x24] sm:$0xf]
  %v1073 = vld [vmem:[%s1062 + $0x28] sm:$0xf]
  %v1074 = vld [vmem:[%s1062 + $0x2c] sm:$0xf]
  %v1075 = vld [vmem:[%s1062 + $0x30] sm:$0xf]
  %v1076 = vld [vmem:[%s1062 + $0x34] sm:$0xf]
  %v1077 = vld [vmem:[%s1062 + $0x38] sm:$0xf]
  %v1078 = vld [vmem:[%s1062 + $0x3c] sm:$0xf]
  %v1095 = vunpack.c.l.b16 %v1063
  %v1096 = vunpack.c.l.b16 %v1064
  %v1097 = vunpack.c.l.b16 %v1065
  %v1098 = vunpack.c.l.b16 %v1066
  %v1099 = vunpack.c.l.b16 %v1067
  %v1100 = vunpack.c.l.b16 %v1068
  %v1101 = vunpack.c.l.b16 %v1069
  %v1102 = vunpack.c.l.b16 %v1070
  %v1103 = vunpack.c.l.b16 %v1071
  %v1104 = vunpack.c.l.b16 %v1072
  %v1105 = vunpack.c.l.b16 %v1073
  %v1106 = vunpack.c.l.b16 %v1074
  %v1107 = vunpack.c.l.b16 %v1075
  %v1108 = vunpack.c.l.b16 %v1076
  %v1109 = vunpack.c.l.b16 %v1077
  %v1110 = vunpack.c.l.b16 %v1078
  %v1111 = vpack.c.b16 %v1096, %v1095
  %v1112 = vpack.c.b16 %v1098, %v1097
  %v1113 = vpack.c.b16 %v1100, %v1099
  %v1114 = vpack.c.b16 %v1102, %v1101
  %v1115 = vpack.c.b16 %v1104, %v1103
  %v1116 = vpack.c.b16 %v1106, %v1105
  %v1117 = vpack.c.b16 %v1108, %v1107
  %v1118 = vpack.c.b16 %v1110, %v1109
  %1127 = vmatprep.subr.bf16.mxu0 0
  %1128 = vmatpush1.bf16.msra.mxu0 %v1118
  %1129 = vmatprep.subr.bf16.mxu0 0
  %1130 = vmatpush1.bf16.msra.mxu0 %v1117
  %1131 = vmatprep.subr.bf16.mxu0 0
  %1132 = vmatpush1.bf16.msra.mxu0 %v1116
  %1133 = vmatprep.subr.bf16.mxu0 0
  %1134 = vmatpush1.bf16.msra.mxu0 %v1115
  %1135 = vmatprep.subr.bf16.mxu0 0
  %1136 = vmatpush1.bf16.msra.mxu0 %v1114
  %1137 = vmatprep.subr.bf16.mxu0 0
  %1138 = vmatpush1.bf16.msra.mxu0 %v1113
  %1139 = vmatprep.subr.bf16.mxu0 0
  %1140 = vmatpush1.bf16.msra.mxu0 %v1112
  %1141 = vmatprep.subr.bf16.mxu0 0
  %1142 = vmatpush1.bf16.msra.mxu0 %v1111
  %1143 = vmatprep.subr.bf16.mxu0 0
  %1144 = vmatpush2.bf16.msra.mxu0 0
  %1145 = vmatprep.subr.bf16.mxu0 0
  %1146 = vmatpush2.bf16.msra.mxu0 0
  %1147 = vmatprep.subr.bf16.mxu0 0
  %1148 = vmatpush2.bf16.msra.mxu0 0
  %1149 = vmatprep.subr.bf16.mxu0 0
  %1150 = vmatpush2.bf16.msra.mxu0 0
  %1151 = vmatprep.subr.bf16.mxu0 0
  %1152 = vmatpush2.bf16.msra.mxu0 0
  %1153 = vmatprep.subr.bf16.mxu0 0
  %1154 = vmatpush2.bf16.msra.mxu0 0
  %1155 = vmatprep.subr.bf16.mxu0 0
  %1156 = vmatpush2.bf16.msra.mxu0 0
  %1157 = vmatprep.subr.bf16.mxu0 0
  %1158 = vmatpush2.bf16.msra.mxu0 0
  %1159 = vmatprep.mubr.bf16.mxu0 0
  %1160 = vmatmul.mubr.bf16.gmra.mxu0 %v1054
  %v1161 = vpop.f32.mrf.mxu0
  %v1162 = vadd.f32 0.0, %v1161
  %v1163 = vpop.f32.mrf.mxu0
  %v1164 = vpop.f32.mrf.mxu0
  %v1165 = vadd.f32 0.0, %v1164
  %v1166 = vpop.f32.mrf.mxu0
  %1167 = vmatprep.mubr.bf16.mxu0 0
  %1168 = vmatmul.mubr.bf16.gmra.mxu0 %v1055
  %v1169 = vpop.f32.mrf.mxu0
  %v1170 = vadd.f32 0.0, %v1169
  %v1171 = vpop.f32.mrf.mxu0
  %v1172 = vpop.f32.mrf.mxu0
  %v1173 = vadd.f32 0.0, %v1172
  %v1174 = vpop.f32.mrf.mxu0
  %1175 = vmatprep.mubr.bf16.mxu0 0
  %1176 = vmatmul.mubr.bf16.gmra.mxu0 %v1056
  %v1177 = vpop.f32.mrf.mxu0
  %v1178 = vadd.f32 0.0, %v1177
  %v1179 = vpop.f32.mrf.mxu0
  %v1180 = vpop.f32.mrf.mxu0
  %v1181 = vadd.f32 0.0, %v1180
  %v1182 = vpop.f32.mrf.mxu0
  %1183 = vmatprep.mubr.bf16.mxu0 0
  %1184 = vmatmul.mubr.bf16.gmra.mxu0 %v1057
  %v1185 = vpop.f32.mrf.mxu0
  %v1186 = vadd.f32 0.0, %v1185
  %v1187 = vpop.f32.mrf.mxu0
  %v1188 = vpop.f32.mrf.mxu0
  %v1189 = vadd.f32 0.0, %v1188
  %v1190 = vpop.f32.mrf.mxu0
  %1191 = vmatprep.mubr.bf16.mxu0 0
  %1192 = vmatmul.mubr.bf16.gmra.mxu0 %v1058
  %v1193 = vpop.f32.mrf.mxu0
  %v1194 = vadd.f32 0.0, %v1193
  %v1195 = vpop.f32.mrf.mxu0
  %v1196 = vpop.f32.mrf.mxu0
  %v1197 = vadd.f32 0.0, %v1196
  %v1198 = vpop.f32.mrf.mxu0
  %1199 = vmatprep.mubr.bf16.mxu0 0
  %1200 = vmatmul.mubr.bf16.gmra.mxu0 %v1059
  %v1201 = vpop.f32.mrf.mxu0
  %v1202 = vadd.f32 0.0, %v1201
  %v1203 = vpop.f32.mrf.mxu0
  %v1204 = vpop.f32.mrf.mxu0
  %v1205 = vadd.f32 0.0, %v1204
  %v1206 = vpop.f32.mrf.mxu0
  %1207 = vmatprep.mubr.bf16.mxu0 0
  %1208 = vmatmul.mubr.bf16.gmra.mxu0 %v1060
  %v1209 = vpop.f32.mrf.mxu0
  %v1210 = vadd.f32 0.0, %v1209
  %v1211 = vpop.f32.mrf.mxu0
  %v1212 = vpop.f32.mrf.mxu0
  %v1213 = vadd.f32 0.0, %v1212
  %v1214 = vpop.f32.mrf.mxu0
  %1215 = vmatprep.mubr.bf16.mxu0 0
  %1216 = vmatmul.mubr.bf16.gmra.mxu0 %v1061
  %v1217 = vpop.f32.mrf.mxu0
  %v1218 = vadd.f32 0.0, %v1217
  %v1219 = vpop.f32.mrf.mxu0
  %v1220 = vpop.f32.mrf.mxu0
  %v1221 = vadd.f32 0.0, %v1220
  %v1222 = vpop.f32.mrf.mxu0
  %1223 = vdwg.mxu0
  %v1224 = vpack.c.bf16 %v1165, %v1162
  %v1225 = vpack.c.bf16 %v1173, %v1170
  %v1226 = vpack.c.bf16 %v1181, %v1178
  %v1227 = vpack.c.bf16 %v1189, %v1186
  %v1228 = vpack.c.bf16 %v1197, %v1194
  %v1229 = vpack.c.bf16 %v1205, %v1202
  %v1230 = vpack.c.bf16 %v1213, %v1210
  %v1231 = vpack.c.bf16 %v1221, %v1218
  %s1232 = scalar_lea.vmem %s3, 3
  %v1233 = vld [vmem:[%s1232] sm:$0x1]
  %v1235 = vlaneseq
  %v1236 = vshrl.u32 %v1235, 7
  %v1237 = vsub.s32 0, %v1236
  %v1238 = vrot.slane %v1233, %v1237
  %1240 = vmatprep.subr.bf16.mxu0 0
  %1241 = vmatpush1.bf16.msra.mxu0 %v1231
  %1242 = vmatprep.subr.bf16.mxu0 0
  %1243 = vmatpush1.bf16.msra.mxu0 %v1230
  %1244 = vmatprep.subr.bf16.mxu0 0
  %1245 = vmatpush1.bf16.msra.mxu0 %v1229
  %1246 = vmatprep.subr.bf16.mxu0 0
  %1247 = vmatpush1.bf16.msra.mxu0 %v1228
  %1248 = vmatprep.subr.bf16.mxu0 0
  %1249 = vmatpush1.bf16.msra.mxu0 %v1227
  %1250 = vmatprep.subr.bf16.mxu0 0
  %1251 = vmatpush1.bf16.msra.mxu0 %v1226
  %1252 = vmatprep.subr.bf16.mxu0 0
  %1253 = vmatpush1.bf16.msra.mxu0 %v1225
  %1254 = vmatprep.subr.bf16.mxu0 0
  %1255 = vmatpush1.bf16.msra.mxu0 %v1224
  %1256 = vmatprep.subr.bf16.mxu0 0
  %1257 = vmatpush2.bf16.msra.mxu0 0
  %1258 = vmatprep.subr.bf16.mxu0 0
  %1259 = vmatpush2.bf16.msra.mxu0 0
  %1260 = vmatprep.subr.bf16.mxu0 0
  %1261 = vmatpush2.bf16.msra.mxu0 0
  %1262 = vmatprep.subr.bf16.mxu0 0
  %1263 = vmatpush2.bf16.msra.mxu0 0
  %1264 = vmatprep.subr.bf16.mxu0 0
  %1265 = vmatpush2.bf16.msra.mxu0 0
  %1266 = vmatprep.subr.bf16.mxu0 0
  %1267 = vmatpush2.bf16.msra.mxu0 0
  %1268 = vmatprep.subr.bf16.mxu0 0
  %1269 = vmatpush2.bf16.msra.mxu0 0
  %1270 = vmatprep.subr.bf16.mxu0 0
  %1271 = vmatpush2.bf16.msra.mxu0 0
  %1272 = vmatprep.mubr.bf16.mxu0 0
  %1273 = vmatmul.mubr.bf16.gmra.mxu0 %v327
  %v1274 = vpop.f32.mrf.mxu0
  %v1275 = vadd.f32 %v1238, %v1274
  %v1276 = vpop.f32.mrf.mxu0
  %v1277 = vpop.f32.mrf.mxu0
  %v1278 = vadd.f32 %v1238, %v1277
  %v1279 = vpop.f32.mrf.mxu0
  %1280 = vmatprep.mubr.bf16.mxu0 0
  %1281 = vmatmul.mubr.bf16.gmra.mxu0 %v328
  %v1282 = vpop.f32.mrf.mxu0
  %v1283 = vadd.f32 %v1238, %v1282
  %v1284 = vpop.f32.mrf.mxu0
  %v1285 = vpop.f32.mrf.mxu0
  %v1286 = vadd.f32 %v1238, %v1285
  %v1287 = vpop.f32.mrf.mxu0
  %1288 = vmatprep.mubr.bf16.mxu0 0
  %1289 = vmatmul.mubr.bf16.gmra.mxu0 %v329
  %v1290 = vpop.f32.mrf.mxu0
  %v1291 = vadd.f32 %v1238, %v1290
  %v1292 = vpop.f32.mrf.mxu0
  %v1293 = vpop.f32.mrf.mxu0
  %v1294 = vadd.f32 %v1238, %v1293
  %v1295 = vpop.f32.mrf.mxu0
  %1296 = vmatprep.mubr.bf16.mxu0 0
  %1297 = vmatmul.mubr.bf16.gmra.mxu0 %v330
  %v1298 = vpop.f32.mrf.mxu0
  %v1299 = vadd.f32 %v1238, %v1298
  %v1300 = vpop.f32.mrf.mxu0
  %v1301 = vpop.f32.mrf.mxu0
  %v1302 = vadd.f32 %v1238, %v1301
  %v1303 = vpop.f32.mrf.mxu0
  %1304 = vmatprep.mubr.bf16.mxu0 0
  %1305 = vmatmul.mubr.bf16.gmra.mxu0 %v331
  %v1306 = vpop.f32.mrf.mxu0
  %v1307 = vadd.f32 %v1238, %v1306
  %v1308 = vpop.f32.mrf.mxu0
  %v1309 = vpop.f32.mrf.mxu0
  %v1310 = vadd.f32 %v1238, %v1309
  %v1311 = vpop.f32.mrf.mxu0
  %1312 = vmatprep.mubr.bf16.mxu0 0
  %1313 = vmatmul.mubr.bf16.gmra.mxu0 %v332
  %v1314 = vpop.f32.mrf.mxu0
  %v1315 = vadd.f32 %v1238, %v1314
  %v1316 = vpop.f32.mrf.mxu0
  %v1317 = vpop.f32.mrf.mxu0
  %v1318 = vadd.f32 %v1238, %v1317
  %v1319 = vpop.f32.mrf.mxu0
  %1320 = vmatprep.mubr.bf16.mxu0 0
  %1321 = vmatmul.mubr.bf16.gmra.mxu0 %v333
  %v1322 = vpop.f32.mrf.mxu0
  %v1323 = vadd.f32 %v1238, %v1322
  %v1324 = vpop.f32.mrf.mxu0
  %v1325 = vpop.f32.mrf.mxu0
  %v1326 = vadd.f32 %v1238, %v1325
  %v1327 = vpop.f32.mrf.mxu0
  %1328 = vmatprep.mubr.bf16.mxu0 0
  %1329 = vmatmul.mubr.bf16.gmra.mxu0 %v334
  %v1330 = vpop.f32.mrf.mxu0
  %v1331 = vadd.f32 %v1238, %v1330
  %v1332 = vpop.f32.mrf.mxu0
  %v1333 = vpop.f32.mrf.mxu0
  %v1334 = vadd.f32 %v1238, %v1333
  %v1335 = vpop.f32.mrf.mxu0
  %1336 = vdwg.mxu0
  %v1337 = vmax.f32 %v1275, 0.0
  %v1338 = vmax.f32 %v1278, 0.0
  %v1339 = vmax.f32 %v1283, 0.0
  %v1340 = vmax.f32 %v1286, 0.0
  %v1341 = vmax.f32 %v1291, 0.0
  %v1342 = vmax.f32 %v1294, 0.0
  %v1343 = vmax.f32 %v1299, 0.0
  %v1344 = vmax.f32 %v1302, 0.0
  %v1345 = vmax.f32 %v1307, 0.0
  %v1346 = vmax.f32 %v1310, 0.0
  %v1347 = vmax.f32 %v1315, 0.0
  %v1348 = vmax.f32 %v1318, 0.0
  %v1349 = vmax.f32 %v1323, 0.0
  %v1350 = vmax.f32 %v1326, 0.0
  %v1351 = vmax.f32 %v1331, 0.0
  %v1352 = vmax.f32 %v1334, 0.0
  %v1353 = vpack.c.bf16 %v1338, %v1337
  %v1354 = vpack.c.bf16 %v1340, %v1339
  %v1355 = vpack.c.bf16 %v1342, %v1341
  %v1356 = vpack.c.bf16 %v1344, %v1343
  %v1357 = vpack.c.bf16 %v1346, %v1345
  %v1358 = vpack.c.bf16 %v1348, %v1347
  %v1359 = vpack.c.bf16 %v1350, %v1349
  %v1360 = vpack.c.bf16 %v1352, %v1351
  %v1361 = vld [vmem:[%s4] sm:$0xf]
  %1362 = vmatprep.subr.bf16.mxu0 0
  %1363 = vmatpush1.bf16.msra.mxu0 %v1360
  %1364 = vmatprep.subr.bf16.mxu0 0
  %1365 = vmatpush1.bf16.msra.mxu0 %v1359
  %1366 = vmatprep.subr.bf16.mxu0 0
  %1367 = vmatpush1.bf16.msra.mxu0 %v1358
  %1368 = vmatprep.subr.bf16.mxu0 0
  %1369 = vmatpush1.bf16.msra.mxu0 %v1357
  %1370 = vmatprep.subr.bf16.mxu0 0
  %1371 = vmatpush1.bf16.msra.mxu0 %v1356
  %1372 = vmatprep.subr.bf16.mxu0 0
  %1373 = vmatpush1.bf16.msra.mxu0 %v1355
  %1374 = vmatprep.subr.bf16.mxu0 0
  %1375 = vmatpush1.bf16.msra.mxu0 %v1354
  %1376 = vmatprep.subr.bf16.mxu0 0
  %1377 = vmatpush1.bf16.msra.mxu0 %v1353
  %1378 = vmatprep.subr.bf16.mxu0 0
  %1379 = vmatpush2.bf16.msra.mxu0 0
  %1380 = vmatprep.subr.bf16.mxu0 0
  %1381 = vmatpush2.bf16.msra.mxu0 0
  %1382 = vmatprep.subr.bf16.mxu0 0
  %1383 = vmatpush2.bf16.msra.mxu0 0
  %1384 = vmatprep.subr.bf16.mxu0 0
  %1385 = vmatpush2.bf16.msra.mxu0 0
  %1386 = vmatprep.subr.bf16.mxu0 0
  %1387 = vmatpush2.bf16.msra.mxu0 0
  %1388 = vmatprep.subr.bf16.mxu0 0
  %1389 = vmatpush2.bf16.msra.mxu0 0
  %1390 = vmatprep.subr.bf16.mxu0 0
  %1391 = vmatpush2.bf16.msra.mxu0 0
  %1392 = vmatprep.subr.bf16.mxu0 0
  %1393 = vmatpush2.bf16.msra.mxu0 0
  %1394 = vmatprep.mubr.bf16.mxu0 0
  %1395 = vmatmul.mubr.bf16.gmra.mxu0 %v1361
  %v1396 = vpop.f32.mrf.mxu0
  %v1397 = vadd.f32 0.0, %v1396
  %v1398 = vpop.f32.mrf.mxu0
  %v1399 = vpop.f32.mrf.mxu0
  %v1400 = vpop.f32.mrf.mxu0
  %1401 = vdwg.mxu0
  %v1402 = vpack.c.bf16 %v1397, %v1397
  %v1403 = vld [vmem:[%s5] sm:$0xf]
  %v1404 = vld [vmem:[%s5 + $0x4] sm:$0xf]
  %v1405 = vld [vmem:[%s5 + $0x8] sm:$0xf]
  %v1406 = vld [vmem:[%s5 + $0xc] sm:$0xf]
  %v1407 = vld [vmem:[%s5 + $0x10] sm:$0xf]
  %v1408 = vld [vmem:[%s5 + $0x14] sm:$0xf]
  %v1409 = vld [vmem:[%s5 + $0x18] sm:$0xf]
  %v1410 = vld [vmem:[%s5 + $0x1c] sm:$0xf]
  %v1411 = vld [vmem:[%s5 + $0x20] sm:$0xf]
  %v1412 = vld [vmem:[%s5 + $0x24] sm:$0xf]
  %v1413 = vld [vmem:[%s5 + $0x28] sm:$0xf]
  %v1414 = vld [vmem:[%s5 + $0x2c] sm:$0xf]
  %v1415 = vld [vmem:[%s5 + $0x30] sm:$0xf]
  %v1416 = vld [vmem:[%s5 + $0x34] sm:$0xf]
  %v1417 = vld [vmem:[%s5 + $0x38] sm:$0xf]
  %v1418 = vld [vmem:[%s5 + $0x3c] sm:$0xf]
  %v1419 = vld [vmem:[%s6] sm:$0x1]
  %v1421 = vlaneseq
  %v1422 = vshrl.u32 %v1421, 7
  %v1423 = vsub.s32 0, %v1422
  %v1424 = vrot.slane %v1419, %v1423
  %v1442 = vunpack.c.l.b16 %v1403
  %v1443 = vunpack.c.l.b16 %v1404
  %v1444 = vunpack.c.l.b16 %v1405
  %v1445 = vunpack.c.l.b16 %v1406
  %v1446 = vunpack.c.l.b16 %v1407
  %v1447 = vunpack.c.l.b16 %v1408
  %v1448 = vunpack.c.l.b16 %v1409
  %v1449 = vunpack.c.l.b16 %v1410
  %v1450 = vunpack.c.l.b16 %v1411
  %v1451 = vunpack.c.l.b16 %v1412
  %v1452 = vunpack.c.l.b16 %v1413
  %v1453 = vunpack.c.l.b16 %v1414
  %v1454 = vunpack.c.l.b16 %v1415
  %v1455 = vunpack.c.l.b16 %v1416
  %v1456 = vunpack.c.l.b16 %v1417
  %v1457 = vunpack.c.l.b16 %v1418
  %v1458 = vpack.c.b16 %v1443, %v1442
  %v1459 = vpack.c.b16 %v1445, %v1444
  %v1460 = vpack.c.b16 %v1447, %v1446
  %v1461 = vpack.c.b16 %v1449, %v1448
  %v1462 = vpack.c.b16 %v1451, %v1450
  %v1463 = vpack.c.b16 %v1453, %v1452
  %v1464 = vpack.c.b16 %v1455, %v1454
  %v1465 = vpack.c.b16 %v1457, %v1456
  %1474 = vmatprep.subr.bf16.mxu0 0
  %1475 = vmatpush1.bf16.msra.mxu0 %v1465
  %1476 = vmatprep.subr.bf16.mxu0 0
  %1477 = vmatpush1.bf16.msra.mxu0 %v1464
  %1478 = vmatprep.subr.bf16.mxu0 0
  %1479 = vmatpush1.bf16.msra.mxu0 %v1463
  %1480 = vmatprep.subr.bf16.mxu0 0
  %1481 = vmatpush1.bf16.msra.mxu0 %v1462
  %1482 = vmatprep.subr.bf16.mxu0 0
  %1483 = vmatpush1.bf16.msra.mxu0 %v1461
  %1484 = vmatprep.subr.bf16.mxu0 0
  %1485 = vmatpush1.bf16.msra.mxu0 %v1460
  %1486 = vmatprep.subr.bf16.mxu0 0
  %1487 = vmatpush1.bf16.msra.mxu0 %v1459
  %1488 = vmatprep.subr.bf16.mxu0 0
  %1489 = vmatpush1.bf16.msra.mxu0 %v1458
  %1490 = vmatprep.subr.bf16.mxu0 0
  %1491 = vmatpush2.bf16.msra.mxu0 0
  %1492 = vmatprep.subr.bf16.mxu0 0
  %1493 = vmatpush2.bf16.msra.mxu0 0
  %1494 = vmatprep.subr.bf16.mxu0 0
  %1495 = vmatpush2.bf16.msra.mxu0 0
  %1496 = vmatprep.subr.bf16.mxu0 0
  %1497 = vmatpush2.bf16.msra.mxu0 0
  %1498 = vmatprep.subr.bf16.mxu0 0
  %1499 = vmatpush2.bf16.msra.mxu0 0
  %1500 = vmatprep.subr.bf16.mxu0 0
  %1501 = vmatpush2.bf16.msra.mxu0 0
  %1502 = vmatprep.subr.bf16.mxu0 0
  %1503 = vmatpush2.bf16.msra.mxu0 0
  %1504 = vmatprep.subr.bf16.mxu0 0
  %1505 = vmatpush2.bf16.msra.mxu0 0
  %1506 = vmatprep.mubr.bf16.mxu0 0
  %1507 = vmatmul.mubr.bf16.gmra.mxu0 %v1402
  %v1508 = vpop.f32.mrf.mxu0
  %v1509 = vadd.f32 %v1424, %v1508
  %v1510 = vpop.f32.mrf.mxu0
  %v1511 = vpop.f32.mrf.mxu0
  %v1512 = vpop.f32.mrf.mxu0
  %1513 = vdwg.mxu0
  %v1514 = vmax.f32 %v1509, 0.0
  %v1515 = vpack.c.bf16 %v1514, %v1514
  %v1516 = vld [vmem:[%s7] sm:$0xf]
  %v1517 = vld [vmem:[%s7 + $0x4] sm:$0xf]
  %v1518 = vld [vmem:[%s7 + $0x8] sm:$0xf]
  %v1519 = vld [vmem:[%s7 + $0xc] sm:$0xf]
  %v1520 = vld [vmem:[%s7 + $0x10] sm:$0xf]
  %v1521 = vld [vmem:[%s7 + $0x14] sm:$0xf]
  %v1522 = vld [vmem:[%s7 + $0x18] sm:$0xf]
  %v1523 = vld [vmem:[%s7 + $0x1c] sm:$0xf]
  %v1524 = vld [vmem:[%s7 + $0x20] sm:$0xf]
  %v1525 = vld [vmem:[%s7 + $0x24] sm:$0xf]
  %v1526 = vld [vmem:[%s7 + $0x28] sm:$0xf]
  %v1527 = vld [vmem:[%s7 + $0x2c] sm:$0xf]
  %v1528 = vld [vmem:[%s7 + $0x30] sm:$0xf]
  %v1529 = vld [vmem:[%s7 + $0x34] sm:$0xf]
  %v1530 = vld [vmem:[%s7 + $0x38] sm:$0xf]
  %v1531 = vld [vmem:[%s7 + $0x3c] sm:$0xf]
  %v1532 = vld [vmem:[%s8] sm:$0x1]
  %v1534 = vlaneseq
  %v1535 = vshrl.u32 %v1534, 7
  %v1536 = vsub.s32 0, %v1535
  %v1537 = vrot.slane %v1532, %v1536
  %v1555 = vunpack.c.l.b16 %v1516
  %v1556 = vunpack.c.l.b16 %v1517
  %v1557 = vunpack.c.l.b16 %v1518
  %v1558 = vunpack.c.l.b16 %v1519
  %v1559 = vunpack.c.l.b16 %v1520
  %v1560 = vunpack.c.l.b16 %v1521
  %v1561 = vunpack.c.l.b16 %v1522
  %v1562 = vunpack.c.l.b16 %v1523
  %v1563 = vunpack.c.l.b16 %v1524
  %v1564 = vunpack.c.l.b16 %v1525
  %v1565 = vunpack.c.l.b16 %v1526
  %v1566 = vunpack.c.l.b16 %v1527
  %v1567 = vunpack.c.l.b16 %v1528
  %v1568 = vunpack.c.l.b16 %v1529
  %v1569 = vunpack.c.l.b16 %v1530
  %v1570 = vunpack.c.l.b16 %v1531
  %v1571 = vpack.c.b16 %v1556, %v1555
  %v1572 = vpack.c.b16 %v1558, %v1557
  %v1573 = vpack.c.b16 %v1560, %v1559
  %v1574 = vpack.c.b16 %v1562, %v1561
  %v1575 = vpack.c.b16 %v1564, %v1563
  %v1576 = vpack.c.b16 %v1566, %v1565
  %v1577 = vpack.c.b16 %v1568, %v1567
  %v1578 = vpack.c.b16 %v1570, %v1569
  %1587 = vmatprep.subr.bf16.mxu0 0
  %1588 = vmatpush1.bf16.msra.mxu0 %v1578
  %1589 = vmatprep.subr.bf16.mxu0 0
  %1590 = vmatpush1.bf16.msra.mxu0 %v1577
  %1591 = vmatprep.subr.bf16.mxu0 0
  %1592 = vmatpush1.bf16.msra.mxu0 %v1576
  %1593 = vmatprep.subr.bf16.mxu0 0
  %1594 = vmatpush1.bf16.msra.mxu0 %v1575
  %1595 = vmatprep.subr.bf16.mxu0 0
  %1596 = vmatpush1.bf16.msra.mxu0 %v1574
  %1597 = vmatprep.subr.bf16.mxu0 0
  %1598 = vmatpush1.bf16.msra.mxu0 %v1573
  %1599 = vmatprep.subr.bf16.mxu0 0
  %1600 = vmatpush1.bf16.msra.mxu0 %v1572
  %1601 = vmatprep.subr.bf16.mxu0 0
  %1602 = vmatpush1.bf16.msra.mxu0 %v1571
  %1603 = vmatprep.subr.bf16.mxu0 0
  %1604 = vmatpush2.bf16.msra.mxu0 0
  %1605 = vmatprep.subr.bf16.mxu0 0
  %1606 = vmatpush2.bf16.msra.mxu0 0
  %1607 = vmatprep.subr.bf16.mxu0 0
  %1608 = vmatpush2.bf16.msra.mxu0 0
  %1609 = vmatprep.subr.bf16.mxu0 0
  %1610 = vmatpush2.bf16.msra.mxu0 0
  %1611 = vmatprep.subr.bf16.mxu0 0
  %1612 = vmatpush2.bf16.msra.mxu0 0
  %1613 = vmatprep.subr.bf16.mxu0 0
  %1614 = vmatpush2.bf16.msra.mxu0 0
  %1615 = vmatprep.subr.bf16.mxu0 0
  %1616 = vmatpush2.bf16.msra.mxu0 0
  %1617 = vmatprep.subr.bf16.mxu0 0
  %1618 = vmatpush2.bf16.msra.mxu0 0
  %1619 = vmatprep.mubr.bf16.mxu0 0
  %1620 = vmatmul.mubr.bf16.gmra.mxu0 %v1515
  %v1621 = vpop.f32.mrf.mxu0
  %v1622 = vadd.f32 %v1537, %v1621
  %v1623 = vpop.f32.mrf.mxu0
  %v1624 = vpop.f32.mrf.mxu0
  %v1625 = vpop.f32.mrf.mxu0
  %1626 = vdwg.mxu0
  %v1627 = vmax.f32 %v1622, 0.0
  %v1628 = vpack.c.bf16 %v1627, %v1627
  %v1629 = vld [vmem:[%s9] sm:$0xf]
  %v1630 = vld [vmem:[%s9 + $0x4] sm:$0xf]
  %v1631 = vld [vmem:[%s9 + $0x8] sm:$0xf]
  %v1632 = vld [vmem:[%s9 + $0xc] sm:$0xf]
  %v1633 = vld [vmem:[%s9 + $0x10] sm:$0xf]
  %v1634 = vld [vmem:[%s9 + $0x14] sm:$0xf]
  %v1635 = vld [vmem:[%s9 + $0x18] sm:$0xf]
  %v1636 = vld [vmem:[%s9 + $0x1c] sm:$0xf]
  %v1637 = vld [vmem:[%s9 + $0x20] sm:$0xf]
  %v1638 = vld [vmem:[%s9 + $0x24] sm:$0xf]
  %v1639 = vld [vmem:[%s9 + $0x28] sm:$0xf]
  %v1640 = vld [vmem:[%s9 + $0x2c] sm:$0xf]
  %v1641 = vld [vmem:[%s9 + $0x30] sm:$0xf]
  %v1642 = vld [vmem:[%s9 + $0x34] sm:$0xf]
  %v1643 = vld [vmem:[%s9 + $0x38] sm:$0xf]
  %v1644 = vld [vmem:[%s9 + $0x3c] sm:$0xf]
  %v1645 = vld [vmem:[%s10] sm:$0x1]
  %v1647 = vlaneseq
  %v1648 = vshrl.u32 %v1647, 7
  %v1649 = vsub.s32 0, %v1648
  %v1650 = vrot.slane %v1645, %v1649
  %v1668 = vunpack.c.l.b16 %v1629
  %v1669 = vunpack.c.l.b16 %v1630
  %v1670 = vunpack.c.l.b16 %v1631
  %v1671 = vunpack.c.l.b16 %v1632
  %v1672 = vunpack.c.l.b16 %v1633
  %v1673 = vunpack.c.l.b16 %v1634
  %v1674 = vunpack.c.l.b16 %v1635
  %v1675 = vunpack.c.l.b16 %v1636
  %v1676 = vunpack.c.l.b16 %v1637
  %v1677 = vunpack.c.l.b16 %v1638
  %v1678 = vunpack.c.l.b16 %v1639
  %v1679 = vunpack.c.l.b16 %v1640
  %v1680 = vunpack.c.l.b16 %v1641
  %v1681 = vunpack.c.l.b16 %v1642
  %v1682 = vunpack.c.l.b16 %v1643
  %v1683 = vunpack.c.l.b16 %v1644
  %v1684 = vpack.c.b16 %v1669, %v1668
  %v1685 = vpack.c.b16 %v1671, %v1670
  %v1686 = vpack.c.b16 %v1673, %v1672
  %v1687 = vpack.c.b16 %v1675, %v1674
  %v1688 = vpack.c.b16 %v1677, %v1676
  %v1689 = vpack.c.b16 %v1679, %v1678
  %v1690 = vpack.c.b16 %v1681, %v1680
  %v1691 = vpack.c.b16 %v1683, %v1682
  %1700 = vmatprep.subr.bf16.mxu0 0
  %1701 = vmatpush1.bf16.msra.mxu0 %v1691
  %1702 = vmatprep.subr.bf16.mxu0 0
  %1703 = vmatpush1.bf16.msra.mxu0 %v1690
  %1704 = vmatprep.subr.bf16.mxu0 0
  %1705 = vmatpush1.bf16.msra.mxu0 %v1689
  %1706 = vmatprep.subr.bf16.mxu0 0
  %1707 = vmatpush1.bf16.msra.mxu0 %v1688
  %1708 = vmatprep.subr.bf16.mxu0 0
  %1709 = vmatpush1.bf16.msra.mxu0 %v1687
  %1710 = vmatprep.subr.bf16.mxu0 0
  %1711 = vmatpush1.bf16.msra.mxu0 %v1686
  %1712 = vmatprep.subr.bf16.mxu0 0
  %1713 = vmatpush1.bf16.msra.mxu0 %v1685
  %1714 = vmatprep.subr.bf16.mxu0 0
  %1715 = vmatpush1.bf16.msra.mxu0 %v1684
  %1716 = vmatprep.subr.bf16.mxu0 0
  %1717 = vmatpush2.bf16.msra.mxu0 0
  %1718 = vmatprep.subr.bf16.mxu0 0
  %1719 = vmatpush2.bf16.msra.mxu0 0
  %1720 = vmatprep.subr.bf16.mxu0 0
  %1721 = vmatpush2.bf16.msra.mxu0 0
  %1722 = vmatprep.subr.bf16.mxu0 0
  %1723 = vmatpush2.bf16.msra.mxu0 0
  %1724 = vmatprep.subr.bf16.mxu0 0
  %1725 = vmatpush2.bf16.msra.mxu0 0
  %1726 = vmatprep.subr.bf16.mxu0 0
  %1727 = vmatpush2.bf16.msra.mxu0 0
  %1728 = vmatprep.subr.bf16.mxu0 0
  %1729 = vmatpush2.bf16.msra.mxu0 0
  %1730 = vmatprep.subr.bf16.mxu0 0
  %1731 = vmatpush2.bf16.msra.mxu0 0
  %1732 = vmatprep.mubr.bf16.mxu0 0
  %1733 = vmatmul.mubr.bf16.gmra.mxu0 %v1628
  %v1734 = vpop.f32.mrf.mxu0
  %v1735 = vadd.f32 %v1650, %v1734
  %v1736 = vpop.f32.mrf.mxu0
  %v1737 = vpop.f32.mrf.mxu0
  %v1738 = vpop.f32.mrf.mxu0
  %1739 = vdwg.mxu0
  %1740 = vst [vmem:[%s11] sm:$0xff] %v1735
  // Predicated region
  $region46: #{gcn_forward.1} parent=0 // pred_check
    _
  $region47: #{gcn_forward.1} parent=0 // pred_check_branch
    %1742 = sbr.rel (0) target = $region49
  $region48: #{gcn_forward.1} parent=0 // pred_region
    _
  $region49: #{gcn_forward.1} parent=0 // pred_fallthru
    _
  // Predicated region
  $region50: #{gcn_forward.1} parent=0 // pred_check
    _
  $region51: #{gcn_forward.1} parent=0 // pred_check_branch
    %1744 = sbr.rel (0) target = $region53
  $region52: #{gcn_forward.1} parent=0 // pred_region
    _
  $region53: #{gcn_forward.1} parent=0 // pred_fallthru
    _

</llo_original>
